<compile_context>
chip_gen: v7x
topology: tpu7x:2x2x1
jax: 0.10.0
libtpu: 0.0.40
codegen_flags: <defaults>
</compile_context>

<pallas_src>
import functools

import jax
import jax.numpy as jnp
from jax import lax
from jax.experimental import pallas as pl
from jax.experimental.pallas import tpu as pltpu


# ----------------------------------------------------------------------------
# Fused Block kernel (imgs_per_step images per grid step, channel-major slab)
# ----------------------------------------------------------------------------
def _block_kernel(x_ref, m_ref, p_ref, o_ref, *,
                  H, W, ips, Cin, Cmid, Cout, offs):
    """Fused Block forward.

    Layouts (sublane axis = images x channels, lane axis = flattened H*W):
      x_ref : (ips*Cin,  H*W)   input slab (contiguous view of NCHW)
      m_ref : (9, H*W)          precomputed 0/1 border masks per 3x3 tap
      p_ref : (R, PW)           packed params slab (see wrapper for layout)
      o_ref : (ips*Cout, H*W)
    """
    HW = H * W
    x = x_ref[...].astype(jnp.float32)            # (ips*Cin, HW)
    masks = m_ref[...].astype(jnp.float32)        # (9, HW)
    p = p_ref[...].astype(jnp.float32)            # (R, PW)

    o_dw1, o_dw2, o_dw3, o_pw1, o_pw2, o_pw3, o_wp = offs
    dw1 = p[o_dw1:o_dw1 + ips * Cin, 0:9]
    dw2 = p[o_dw2:o_dw2 + ips * Cmid, 0:9]
    dw3 = p[o_dw3:o_dw3 + ips * Cmid, 0:9]
    pw1 = p[o_pw1:o_pw1 + Cmid, 0:Cin]
    sh1 = p[o_pw1:o_pw1 + Cmid, Cin:Cin + 1]
    pw2 = p[o_pw2:o_pw2 + Cmid, 0:Cmid]
    sh2 = p[o_pw2:o_pw2 + Cmid, Cmid:Cmid + 1]
    pw3 = p[o_pw3:o_pw3 + Cout, 0:Cmid]
    sh3 = p[o_pw3:o_pw3 + Cout, Cmid:Cmid + 1]
    wp = p[o_wp:o_wp + Cout, 0:Cin]

    def depthwise3x3(a, dww):                     # a:(ips*C,HW), dww:(ips*C,9)
        acc = None
        for t in range(9):
            di, dj = t // 3 - 1, t % 3 - 1
            off = di * W + dj
            # shifted[:, pos] == a[:, pos + off]; roll runs on the XLU so the
            # 9 shifts don't compete with the VPU FMAs for the VALU slot.
            shifted = a if off == 0 else pltpu.roll(a, shift=(-off) % HW, axis=1)
            term = shifted * dww[:, t:t + 1]
            if not (di == 0 and dj == 0):         # center tap: mask is all-true
                term = term * masks[t:t + 1, :]   # precomputed border mask
            acc = term if acc is None else acc + term
        return acc

    def pointwise_relu(a, pwt, sh, Ci, Co):       # (ips*Ci,HW) -> (ips*Co,HW)
        # BN already folded into pwt / sh.
        use_mxu = (Ci >= 16 and Co >= 16)         # real DFANet sizes -> MXU
        outs = []
        for n in range(ips):
            an = a[n * Ci:(n + 1) * Ci, :]
            if use_mxu:
                z = jnp.dot(pwt, an, preferred_element_type=jnp.float32)
            else:
                # Tiny Ci/Co: keep on the VPU as broadcast-FMAs.
                z = pwt[:, 0:1] * an[0:1, :]
                for i in range(1, Ci):
                    z = z + pwt[:, i:i + 1] * an[i:i + 1, :]
            outs.append(jnp.maximum(z + sh, 0.0))
        return outs[0] if ips == 1 else jnp.concatenate(outs, axis=0)

    out1 = pointwise_relu(depthwise3x3(x, dw1), pw1, sh1, Cin, Cmid)
    out2 = pointwise_relu(depthwise3x3(out1, dw2), pw2, sh2, Cmid, Cmid)
    out3 = pointwise_relu(depthwise3x3(out2, dw3), pw3, sh3, Cmid, Cout)

    # 1x1 projection (no bias / no BN) + residual add, fused into this kernel.
    use_mxu_proj = (Cin >= 16 and Cout >= 16)
    parts = []
    for n in range(ips):
        xn = x[n * Cin:(n + 1) * Cin, :]
        r = out3[n * Cout:(n + 1) * Cout, :]
        if use_mxu_proj:
            r = r + jnp.dot(wp, xn, preferred_element_type=jnp.float32)
        else:
            for i in range(Cin):
                r = r + wp[:, i:i + 1] * xn[i:i + 1, :]
        parts.append(r)
    res = parts[0] if ips == 1 else jnp.concatenate(parts, axis=0)
    o_ref[...] = res.astype(o_ref.dtype)          # one lane-dense store


# ----------------------------------------------------------------------------
# Wrapper: parameter folding / packing + pallas_call
# ----------------------------------------------------------------------------
def _fold_stage(dw_w, dw_b, pw_w, pw_b, scale, shift, ips):
    """Fold eval-mode BN + conv biases; tile depthwise taps across images."""
    cin = dw_w.shape[-1]
    cout = pw_w.shape[-1]
    dw_t = jnp.transpose(dw_w, (2, 0, 1)).reshape(cin, 9)            # (Cin, 9)
    dw_t = jnp.tile(dw_t, (ips, 1))                                  # (ips*Cin, 9)
    pw_t = (pw_w * scale[None, :]).T                                 # (Cout, Cin)
    sh = (shift + scale * (pw_b + dw_b @ pw_w)).reshape(cout, 1)     # (Cout, 1)
    pwsh = jnp.concatenate([pw_t, sh], axis=1)                       # (Cout, Cin+1)
    return dw_t.astype(jnp.float32), pwsh.astype(jnp.float32)


def _pack_params(arrs, width):
    """Pack all tiny weight tensors into one zero-padded (rows, width) slab."""
    rows = sum(int(a.shape[0]) for a in arrs)
    slab = jnp.zeros((rows, width), jnp.float32)
    offs, r = [], 0
    for a in arrs:
        offs.append(r)
        slab = slab.at[r:r + a.shape[0], 0:a.shape[1]].set(a)
        r += int(a.shape[0])
    return slab, tuple(offs)


def _make_masks(H, W):
    """Precompute (9, H*W) 0/1 border masks for the 3x3 taps (hoisted out)."""
    flat = jnp.arange(H * W, dtype=jnp.int32)
    row, col = flat // W, flat % W
    rows = []
    for ki in range(3):
        for kj in range(3):
            di, dj = ki - 1, kj - 1
            valid = ((row + di >= 0) & (row + di < H) &
                     (col + dj >= 0) & (col + dj < W))
            rows.append(valid.astype(jnp.float32))
    return jnp.stack(rows, axis=0)


def _default_vmem_limit():
    """~75% of physical VMEM (≈96MiB on v5e/v6e, ≈48MiB on v7x)."""
    try:
        cap = getattr(pltpu.get_tpu_info(), "vmem_capacity_bytes",
                      64 * 1024 * 1024)
    except Exception:
        cap = 64 * 1024 * 1024
    return min(int(cap * 0.75), 100 * 1024 * 1024)


def block_forward(x, params, stride=1, imgs_per_step=None,
                  act_dtype=jnp.float32):
    """x: NCHW (N, Cin, H, W) float32 -> NCHW (N, Cout, H, W) float32.

    act_dtype: HBM storage dtype for activations (bf16 recommended on v6e/v7x
    at production sizes; compute/accumulation is always f32 in-kernel).
    """
    if stride != 1:
        # TODO(synk): add stride>1 (subsample the stage-1 depthwise accumulator and the residual read in-kernel).
        raise NotImplementedError("fused Block kernel implements stride=1")

    N, Cin, H, W = x.shape
    HW = H * W
    Cmid = params["conv1"][2].shape[1]
    Cout = params["conv3"][2].shape[1]

    if imgs_per_step is None:
        # Pack enough images per step to fill >=8 sublanes at the narrowest
        # stage.  At the demo size this gives grid=(1,): the per-step overhead
        # is paid once and every VPU/XLU op runs on full sublanes.
        # TODO(synk): on v7x with N>2 keep the grid divisible by 2 (or split
        # over spatial row-tiles) so both TensorCores stay busy; also add row
        # tiling with a 1-row halo for production C/HW that exceed 64MiB VMEM.
        imgs_per_step = min(N, max(1, -(-8 // max(1, min(Cin, Cmid)))))
        while N % imgs_per_step != 0:
            imgs_per_step -= 1
    assert N % imgs_per_step == 0
    ips = imgs_per_step
    n_steps = N // ips

    dw1, pwsh1 = _fold_stage(*params["conv1"], ips)
    dw2, pwsh2 = _fold_stage(*params["conv2"], ips)
    dw3, pwsh3 = _fold_stage(*params["conv3"], ips)
    wp_t = jnp.asarray(params["proj"], jnp.float32).T                # (Cout, Cin)

    slab_width = max(9, Cin + 1, Cmid + 1, Cin)
    slab, offs = _pack_params([dw1, dw2, dw3, pwsh1, pwsh2, pwsh3, wp_t],
                              slab_width)
    masks = _make_masks(H, W)

    # Contiguous reshape only (NCHW-native channel-major, spatial in lanes).
    x_flat = x.reshape(N * Cin, HW).astype(act_dtype)

    kernel = functools.partial(_block_kernel, H=H, W=W, ips=ips,
                               Cin=Cin, Cmid=Cmid, Cout=Cout, offs=offs)
    const = lambda g: (0, 0)
    out = pl.pallas_call(
        kernel,
        out_shape=jax.ShapeDtypeStruct((N * Cout, HW), act_dtype),
        grid_spec=pltpu.PrefetchScalarGridSpec(
            num_scalar_prefetch=0,
            grid=(n_steps,),
            in_specs=[
                pl.BlockSpec((ips * Cin, HW), lambda g: (g, 0)),     # x slab
                pl.BlockSpec((9, HW), const),                        # masks
                pl.BlockSpec(slab.shape, const),                     # packed params
            ],
            out_specs=pl.BlockSpec((ips * Cout, HW), lambda g: (g, 0)),
        ),
        compiler_params=pltpu.CompilerParams(
            dimension_semantics=("parallel",),
            vmem_limit_bytes=_default_vmem_limit(),
        ),
    )(x_flat, masks, slab)

    return out.reshape(N, Cout, H, W).astype(jnp.float32)


# ----------------------------------------------------------------------------
# Parameter init + pure-JAX reference (NCHW) for verification
# ----------------------------------------------------------------------------
def make_sep_stage_params(key, cin, cout):
    ks = jax.random.split(key, 8)
    dw_w = jax.random.normal(ks[0], (3, 3, cin), jnp.float32) * 0.2
    dw_b = jax.random.normal(ks[1], (cin,), jnp.float32) * 0.1
    pw_w = jax.random.normal(ks[2], (cin, cout), jnp.float32) * 0.2
    pw_b = jax.random.normal(ks[3], (cout,), jnp.float32) * 0.1
    gamma = 1.0 + 0.1 * jax.random.normal(ks[4], (cout,), jnp.float32)
    beta = 0.1 * jax.random.normal(ks[5], (cout,), jnp.float32)
    rmean = 0.1 * jax.random.normal(ks[6], (cout,), jnp.float32)
    rvar = jnp.abs(1.0 + 0.1 * jax.random.normal(ks[7], (cout,), jnp.float32))
    eps = 1e-5
    scale = gamma / jnp.sqrt(rvar + eps)
    shift = beta - rmean * scale
    return (dw_w, dw_b, pw_w, pw_b, scale, shift)


def ref_sep_bn_relu(x, dw_w, dw_b, pw_w, pw_b, scale, shift, stride=1):
    cin, cout = pw_w.shape
    dn = ("NCHW", "HWIO", "NCHW")
    y = lax.conv_general_dilated(x, dw_w.reshape(3, 3, 1, cin), (stride, stride),
                                 ((1, 1), (1, 1)), dimension_numbers=dn,
                                 feature_group_count=cin)
    y = y + dw_b.reshape(1, cin, 1, 1)
    z = lax.conv_general_dilated(y, pw_w.reshape(1, 1, cin, cout), (1, 1),
                                 "VALID", dimension_numbers=dn)
    z = z + pw_b.reshape(1, cout, 1, 1)
    z = z * scale.reshape(1, cout, 1, 1) + shift.reshape(1, cout, 1, 1)
    return jnp.maximum(z, 0.0)


def ref_block(x, params, stride=1):
    out = ref_sep_bn_relu(x, *params["conv1"], stride=stride)
    out = ref_sep_bn_relu(out, *params["conv2"], stride=1)
    out = ref_sep_bn_relu(out, *params["conv3"], stride=1)
    cin, cout = params["proj"].shape
    dn = ("NCHW", "HWIO", "NCHW")
    proj = lax.conv_general_dilated(x, params["proj"].reshape(1, 1, cin, cout),
                                    (stride, stride), "VALID",
                                    dimension_numbers=dn)
    return out + proj


if __name__ == "__main__":
    # Block(inputChannel=4, outputChannel=8, stride=1); input NCHW (2, 4, 16, 16),
    # matching the PyTorch module's layout directly.
    N, H, W = 2, 16, 16
    in_ch, out_ch, stride = 4, 8, 1
    mid_ch = out_ch // 4

    root = jax.random.PRNGKey(0)
    kx, k1, k2, k3, kp = jax.random.split(root, 5)

    x = jax.random.normal(kx, (N, in_ch, H, W), jnp.float32)

    params = {
        "conv1": make_sep_stage_params(k1, in_ch, mid_ch),
        "conv2": make_sep_stage_params(k2, mid_ch, mid_ch),
        "conv3": make_sep_stage_params(k3, mid_ch, out_ch),
        "proj": jax.random.normal(kp, (in_ch, out_ch), jnp.float32) * 0.2,
    }

    out = jax.block_until_ready(block_forward(x, params, stride=stride))
    ref = jax.block_until_ready(ref_block(x, params, stride=stride))

    assert out.shape == ref.shape, (out.shape, ref.shape)
    max_err = float(jnp.max(jnp.abs(out - ref)))
    assert max_err < 1e-4, f"max abs error {max_err}"

    print("KERNEL_OK")
</pallas_src>

<mosaic_0001>
module attributes {stable_mosaic.version = 11 : i64} {
  func.func @_block_kernel(%arg0: i32, %arg1: memref<8x256xf32, #tpu.memory_space<vmem>>, %arg2: memref<9x256xf32, #tpu.memory_space<vmem>>, %arg3: memref<36x9xf32, #tpu.memory_space<vmem>>, %arg4: memref<16x256xf32, #tpu.memory_space<vmem>>) attributes {dimension_semantics = [#tpu.dimension_semantics<parallel>], iteration_bounds = array<i64: 1>, scalar_prefetch = 0 : i64, scratch_operands = 0 : i64, tpu.core_type = #tpu.core_type<tc>, window_params = [{transform_indices = @transform_0, window_bounds = array<i64: 8, 256>}, {pipeline_mode = #tpu.pipeline_mode<synchronous>, transform_indices = @transform_1, window_bounds = array<i64: 9, 256>}, {pipeline_mode = #tpu.pipeline_mode<synchronous>, transform_indices = @transform_2, window_bounds = array<i64: 36, 9>}, {transform_indices = @transform_3, window_bounds = array<i64: 16, 256>}]} {
    %c0 = arith.constant 0 : index
    %c0_0 = arith.constant 0 : index
    %0 = vector.load %arg1[%c0, %c0_0] : memref<8x256xf32, #tpu.memory_space<vmem>>, vector<8x256xf32>
    %c0_1 = arith.constant 0 : index
    %c0_2 = arith.constant 0 : index
    %1 = vector.load %arg2[%c0_1, %c0_2] : memref<9x256xf32, #tpu.memory_space<vmem>>, vector<9x256xf32>
    %c0_3 = arith.constant 0 : index
    %c0_4 = arith.constant 0 : index
    %2 = vector.load %arg3[%c0_3, %c0_4] : memref<36x9xf32, #tpu.memory_space<vmem>>, vector<36x9xf32>
    %3 = vector.extract_strided_slice %2 {offsets = [0, 0], sizes = [8, 9], strides = [1, 1]} : vector<36x9xf32> to vector<8x9xf32>
    %4 = vector.extract_strided_slice %2 {offsets = [8, 0], sizes = [4, 9], strides = [1, 1]} : vector<36x9xf32> to vector<4x9xf32>
    %5 = vector.extract_strided_slice %2 {offsets = [12, 0], sizes = [4, 9], strides = [1, 1]} : vector<36x9xf32> to vector<4x9xf32>
    %6 = vector.extract_strided_slice %2 {offsets = [16, 0], sizes = [2, 4], strides = [1, 1]} : vector<36x9xf32> to vector<2x4xf32>
    %7 = vector.extract_strided_slice %2 {offsets = [16, 4], sizes = [2, 1], strides = [1, 1]} : vector<36x9xf32> to vector<2x1xf32>
    %8 = vector.extract_strided_slice %2 {offsets = [18, 0], sizes = [2, 2], strides = [1, 1]} : vector<36x9xf32> to vector<2x2xf32>
    %9 = vector.extract_strided_slice %2 {offsets = [18, 2], sizes = [2, 1], strides = [1, 1]} : vector<36x9xf32> to vector<2x1xf32>
    %10 = vector.extract_strided_slice %2 {offsets = [20, 0], sizes = [8, 2], strides = [1, 1]} : vector<36x9xf32> to vector<8x2xf32>
    %11 = vector.extract_strided_slice %2 {offsets = [20, 2], sizes = [8, 1], strides = [1, 1]} : vector<36x9xf32> to vector<8x1xf32>
    %12 = vector.extract_strided_slice %2 {offsets = [28, 0], sizes = [8, 4], strides = [1, 1]} : vector<36x9xf32> to vector<8x4xf32>
    %c17_i32 = arith.constant 17 : i32
    %13 = tpu.dynamic_rotate %0 by %c17_i32 dim 1 : vector<8x256xf32>, i32 -> vector<8x256xf32>
    %14 = vector.extract_strided_slice %3 {offsets = [0, 0], sizes = [8, 1], strides = [1, 1]} : vector<8x9xf32> to vector<8x1xf32>
    %15 = vector.broadcast %14 : vector<8x1xf32> to vector<8x256xf32>
    %16 = arith.mulf %13, %15 : vector<8x256xf32>
    %17 = vector.extract_strided_slice %1 {offsets = [0, 0], sizes = [1, 256], strides = [1, 1]} : vector<9x256xf32> to vector<1x256xf32>
    %18 = vector.broadcast %17 : vector<1x256xf32> to vector<8x256xf32>
    %19 = arith.mulf %16, %18 : vector<8x256xf32>
    %c16_i32 = arith.constant 16 : i32
    %20 = tpu.dynamic_rotate %0 by %c16_i32 dim 1 : vector<8x256xf32>, i32 -> vector<8x256xf32>
    %21 = vector.extract_strided_slice %3 {offsets = [0, 1], sizes = [8, 1], strides = [1, 1]} : vector<8x9xf32> to vector<8x1xf32>
    %22 = vector.broadcast %21 : vector<8x1xf32> to vector<8x256xf32>
    %23 = arith.mulf %20, %22 : vector<8x256xf32>
    %24 = vector.extract_strided_slice %1 {offsets = [1, 0], sizes = [1, 256], strides = [1, 1]} : vector<9x256xf32> to vector<1x256xf32>
    %25 = vector.broadcast %24 : vector<1x256xf32> to vector<8x256xf32>
    %26 = arith.mulf %23, %25 : vector<8x256xf32>
    %27 = arith.addf %19, %26 : vector<8x256xf32>
    %c15_i32 = arith.constant 15 : i32
    %28 = tpu.dynamic_rotate %0 by %c15_i32 dim 1 : vector<8x256xf32>, i32 -> vector<8x256xf32>
    %29 = vector.extract_strided_slice %3 {offsets = [0, 2], sizes = [8, 1], strides = [1, 1]} : vector<8x9xf32> to vector<8x1xf32>
    %30 = vector.broadcast %29 : vector<8x1xf32> to vector<8x256xf32>
    %31 = arith.mulf %28, %30 : vector<8x256xf32>
    %32 = vector.extract_strided_slice %1 {offsets = [2, 0], sizes = [1, 256], strides = [1, 1]} : vector<9x256xf32> to vector<1x256xf32>
    %33 = vector.broadcast %32 : vector<1x256xf32> to vector<8x256xf32>
    %34 = arith.mulf %31, %33 : vector<8x256xf32>
    %35 = arith.addf %27, %34 : vector<8x256xf32>
    %c1_i32 = arith.constant 1 : i32
    %36 = tpu.dynamic_rotate %0 by %c1_i32 dim 1 : vector<8x256xf32>, i32 -> vector<8x256xf32>
    %37 = vector.extract_strided_slice %3 {offsets = [0, 3], sizes = [8, 1], strides = [1, 1]} : vector<8x9xf32> to vector<8x1xf32>
    %38 = vector.broadcast %37 : vector<8x1xf32> to vector<8x256xf32>
    %39 = arith.mulf %36, %38 : vector<8x256xf32>
    %40 = vector.extract_strided_slice %1 {offsets = [3, 0], sizes = [1, 256], strides = [1, 1]} : vector<9x256xf32> to vector<1x256xf32>
    %41 = vector.broadcast %40 : vector<1x256xf32> to vector<8x256xf32>
    %42 = arith.mulf %39, %41 : vector<8x256xf32>
    %43 = arith.addf %35, %42 : vector<8x256xf32>
    %44 = vector.extract_strided_slice %3 {offsets = [0, 4], sizes = [8, 1], strides = [1, 1]} : vector<8x9xf32> to vector<8x1xf32>
    %45 = vector.broadcast %44 : vector<8x1xf32> to vector<8x256xf32>
    %46 = arith.mulf %0, %45 : vector<8x256xf32>
    %47 = arith.addf %43, %46 : vector<8x256xf32>
    %c255_i32 = arith.constant 255 : i32
    %48 = tpu.dynamic_rotate %0 by %c255_i32 dim 1 : vector<8x256xf32>, i32 -> vector<8x256xf32>
    %49 = vector.extract_strided_slice %3 {offsets = [0, 5], sizes = [8, 1], strides = [1, 1]} : vector<8x9xf32> to vector<8x1xf32>
    %50 = vector.broadcast %49 : vector<8x1xf32> to vector<8x256xf32>
    %51 = arith.mulf %48, %50 : vector<8x256xf32>
    %52 = vector.extract_strided_slice %1 {offsets = [5, 0], sizes = [1, 256], strides = [1, 1]} : vector<9x256xf32> to vector<1x256xf32>
    %53 = vector.broadcast %52 : vector<1x256xf32> to vector<8x256xf32>
    %54 = arith.mulf %51, %53 : vector<8x256xf32>
    %55 = arith.addf %47, %54 : vector<8x256xf32>
    %c241_i32 = arith.constant 241 : i32
    %56 = tpu.dynamic_rotate %0 by %c241_i32 dim 1 : vector<8x256xf32>, i32 -> vector<8x256xf32>
    %57 = vector.extract_strided_slice %3 {offsets = [0, 6], sizes = [8, 1], strides = [1, 1]} : vector<8x9xf32> to vector<8x1xf32>
    %58 = vector.broadcast %57 : vector<8x1xf32> to vector<8x256xf32>
    %59 = arith.mulf %56, %58 : vector<8x256xf32>
    %60 = vector.extract_strided_slice %1 {offsets = [6, 0], sizes = [1, 256], strides = [1, 1]} : vector<9x256xf32> to vector<1x256xf32>
    %61 = vector.broadcast %60 : vector<1x256xf32> to vector<8x256xf32>
    %62 = arith.mulf %59, %61 : vector<8x256xf32>
    %63 = arith.addf %55, %62 : vector<8x256xf32>
    %c240_i32 = arith.constant 240 : i32
    %64 = tpu.dynamic_rotate %0 by %c240_i32 dim 1 : vector<8x256xf32>, i32 -> vector<8x256xf32>
    %65 = vector.extract_strided_slice %3 {offsets = [0, 7], sizes = [8, 1], strides = [1, 1]} : vector<8x9xf32> to vector<8x1xf32>
    %66 = vector.broadcast %65 : vector<8x1xf32> to vector<8x256xf32>
    %67 = arith.mulf %64, %66 : vector<8x256xf32>
    %68 = vector.extract_strided_slice %1 {offsets = [7, 0], sizes = [1, 256], strides = [1, 1]} : vector<9x256xf32> to vector<1x256xf32>
    %69 = vector.broadcast %68 : vector<1x256xf32> to vector<8x256xf32>
    %70 = arith.mulf %67, %69 : vector<8x256xf32>
    %71 = arith.addf %63, %70 : vector<8x256xf32>
    %c239_i32 = arith.constant 239 : i32
    %72 = tpu.dynamic_rotate %0 by %c239_i32 dim 1 : vector<8x256xf32>, i32 -> vector<8x256xf32>
    %73 = vector.extract_strided_slice %3 {offsets = [0, 8], sizes = [8, 1], strides = [1, 1]} : vector<8x9xf32> to vector<8x1xf32>
    %74 = vector.broadcast %73 : vector<8x1xf32> to vector<8x256xf32>
    %75 = arith.mulf %72, %74 : vector<8x256xf32>
    %76 = vector.extract_strided_slice %1 {offsets = [8, 0], sizes = [1, 256], strides = [1, 1]} : vector<9x256xf32> to vector<1x256xf32>
    %77 = vector.broadcast %76 : vector<1x256xf32> to vector<8x256xf32>
    %78 = arith.mulf %75, %77 : vector<8x256xf32>
    %79 = arith.addf %71, %78 : vector<8x256xf32>
    %80 = vector.extract_strided_slice %79 {offsets = [0, 0], sizes = [4, 256], strides = [1, 1]} : vector<8x256xf32> to vector<4x256xf32>
    %81 = vector.extract_strided_slice %6 {offsets = [0, 0], sizes = [2, 1], strides = [1, 1]} : vector<2x4xf32> to vector<2x1xf32>
    %82 = vector.extract_strided_slice %80 {offsets = [0, 0], sizes = [1, 256], strides = [1, 1]} : vector<4x256xf32> to vector<1x256xf32>
    %83 = vector.broadcast %81 : vector<2x1xf32> to vector<2x256xf32>
    %84 = vector.broadcast %82 : vector<1x256xf32> to vector<2x256xf32>
    %85 = arith.mulf %83, %84 : vector<2x256xf32>
    %86 = vector.extract_strided_slice %6 {offsets = [0, 1], sizes = [2, 1], strides = [1, 1]} : vector<2x4xf32> to vector<2x1xf32>
    %87 = vector.extract_strided_slice %80 {offsets = [1, 0], sizes = [1, 256], strides = [1, 1]} : vector<4x256xf32> to vector<1x256xf32>
    %88 = vector.broadcast %86 : vector<2x1xf32> to vector<2x256xf32>
    %89 = vector.broadcast %87 : vector<1x256xf32> to vector<2x256xf32>
    %90 = arith.mulf %88, %89 : vector<2x256xf32>
    %91 = arith.addf %85, %90 : vector<2x256xf32>
    %92 = vector.extract_strided_slice %6 {offsets = [0, 2], sizes = [2, 1], strides = [1, 1]} : vector<2x4xf32> to vector<2x1xf32>
    %93 = vector.extract_strided_slice %80 {offsets = [2, 0], sizes = [1, 256], strides = [1, 1]} : vector<4x256xf32> to vector<1x256xf32>
    %94 = vector.broadcast %92 : vector<2x1xf32> to vector<2x256xf32>
    %95 = vector.broadcast %93 : vector<1x256xf32> to vector<2x256xf32>
    %96 = arith.mulf %94, %95 : vector<2x256xf32>
    %97 = arith.addf %91, %96 : vector<2x256xf32>
    %98 = vector.extract_strided_slice %6 {offsets = [0, 3], sizes = [2, 1], strides = [1, 1]} : vector<2x4xf32> to vector<2x1xf32>
    %99 = vector.extract_strided_slice %80 {offsets = [3, 0], sizes = [1, 256], strides = [1, 1]} : vector<4x256xf32> to vector<1x256xf32>
    %100 = vector.broadcast %98 : vector<2x1xf32> to vector<2x256xf32>
    %101 = vector.broadcast %99 : vector<1x256xf32> to vector<2x256xf32>
    %102 = arith.mulf %100, %101 : vector<2x256xf32>
    %103 = arith.addf %97, %102 : vector<2x256xf32>
    %104 = vector.broadcast %7 : vector<2x1xf32> to vector<2x256xf32>
    %105 = arith.addf %103, %104 : vector<2x256xf32>
    %cst = arith.constant 0.000000e+00 : f32
    %106 = vector.broadcast %cst : f32 to vector<2x256xf32>
    %107 = arith.maximumf %105, %106 : vector<2x256xf32>
    %108 = vector.extract_strided_slice %79 {offsets = [4, 0], sizes = [4, 256], strides = [1, 1]} : vector<8x256xf32> to vector<4x256xf32>
    %109 = vector.extract_strided_slice %6 {offsets = [0, 0], sizes = [2, 1], strides = [1, 1]} : vector<2x4xf32> to vector<2x1xf32>
    %110 = vector.extract_strided_slice %108 {offsets = [0, 0], sizes = [1, 256], strides = [1, 1]} : vector<4x256xf32> to vector<1x256xf32>
    %111 = vector.broadcast %109 : vector<2x1xf32> to vector<2x256xf32>
    %112 = vector.broadcast %110 : vector<1x256xf32> to vector<2x256xf32>
    %113 = arith.mulf %111, %112 : vector<2x256xf32>
    %114 = vector.extract_strided_slice %6 {offsets = [0, 1], sizes = [2, 1], strides = [1, 1]} : vector<2x4xf32> to vector<2x1xf32>
    %115 = vector.extract_strided_slice %108 {offsets = [1, 0], sizes = [1, 256], strides = [1, 1]} : vector<4x256xf32> to vector<1x256xf32>
    %116 = vector.broadcast %114 : vector<2x1xf32> to vector<2x256xf32>
    %117 = vector.broadcast %115 : vector<1x256xf32> to vector<2x256xf32>
    %118 = arith.mulf %116, %117 : vector<2x256xf32>
    %119 = arith.addf %113, %118 : vector<2x256xf32>
    %120 = vector.extract_strided_slice %6 {offsets = [0, 2], sizes = [2, 1], strides = [1, 1]} : vector<2x4xf32> to vector<2x1xf32>
    %121 = vector.extract_strided_slice %108 {offsets = [2, 0], sizes = [1, 256], strides = [1, 1]} : vector<4x256xf32> to vector<1x256xf32>
    %122 = vector.broadcast %120 : vector<2x1xf32> to vector<2x256xf32>
    %123 = vector.broadcast %121 : vector<1x256xf32> to vector<2x256xf32>
    %124 = arith.mulf %122, %123 : vector<2x256xf32>
    %125 = arith.addf %119, %124 : vector<2x256xf32>
    %126 = vector.extract_strided_slice %6 {offsets = [0, 3], sizes = [2, 1], strides = [1, 1]} : vector<2x4xf32> to vector<2x1xf32>
    %127 = vector.extract_strided_slice %108 {offsets = [3, 0], sizes = [1, 256], strides = [1, 1]} : vector<4x256xf32> to vector<1x256xf32>
    %128 = vector.broadcast %126 : vector<2x1xf32> to vector<2x256xf32>
    %129 = vector.broadcast %127 : vector<1x256xf32> to vector<2x256xf32>
    %130 = arith.mulf %128, %129 : vector<2x256xf32>
    %131 = arith.addf %125, %130 : vector<2x256xf32>
    %132 = vector.broadcast %7 : vector<2x1xf32> to vector<2x256xf32>
    %133 = arith.addf %131, %132 : vector<2x256xf32>
    %cst_5 = arith.constant 0.000000e+00 : f32
    %134 = vector.broadcast %cst_5 : f32 to vector<2x256xf32>
    %135 = arith.maximumf %133, %134 : vector<2x256xf32>
    %136 = tpu.concatenate %107, %135 in 0 : vector<2x256xf32>, vector<2x256xf32> -> vector<4x256xf32>
    %c17_i32_6 = arith.constant 17 : i32
    %137 = tpu.dynamic_rotate %136 by %c17_i32_6 dim 1 : vector<4x256xf32>, i32 -> vector<4x256xf32>
    %138 = vector.extract_strided_slice %4 {offsets = [0, 0], sizes = [4, 1], strides = [1, 1]} : vector<4x9xf32> to vector<4x1xf32>
    %139 = vector.broadcast %138 : vector<4x1xf32> to vector<4x256xf32>
    %140 = arith.mulf %137, %139 : vector<4x256xf32>
    %141 = vector.extract_strided_slice %1 {offsets = [0, 0], sizes = [1, 256], strides = [1, 1]} : vector<9x256xf32> to vector<1x256xf32>
    %142 = vector.broadcast %141 : vector<1x256xf32> to vector<4x256xf32>
    %143 = arith.mulf %140, %142 : vector<4x256xf32>
    %c16_i32_7 = arith.constant 16 : i32
    %144 = tpu.dynamic_rotate %136 by %c16_i32_7 dim 1 : vector<4x256xf32>, i32 -> vector<4x256xf32>
    %145 = vector.extract_strided_slice %4 {offsets = [0, 1], sizes = [4, 1], strides = [1, 1]} : vector<4x9xf32> to vector<4x1xf32>
    %146 = vector.broadcast %145 : vector<4x1xf32> to vector<4x256xf32>
    %147 = arith.mulf %144, %146 : vector<4x256xf32>
    %148 = vector.extract_strided_slice %1 {offsets = [1, 0], sizes = [1, 256], strides = [1, 1]} : vector<9x256xf32> to vector<1x256xf32>
    %149 = vector.broadcast %148 : vector<1x256xf32> to vector<4x256xf32>
    %150 = arith.mulf %147, %149 : vector<4x256xf32>
    %151 = arith.addf %143, %150 : vector<4x256xf32>
    %c15_i32_8 = arith.constant 15 : i32
    %152 = tpu.dynamic_rotate %136 by %c15_i32_8 dim 1 : vector<4x256xf32>, i32 -> vector<4x256xf32>
    %153 = vector.extract_strided_slice %4 {offsets = [0, 2], sizes = [4, 1], strides = [1, 1]} : vector<4x9xf32> to vector<4x1xf32>
    %154 = vector.broadcast %153 : vector<4x1xf32> to vector<4x256xf32>
    %155 = arith.mulf %152, %154 : vector<4x256xf32>
    %156 = vector.extract_strided_slice %1 {offsets = [2, 0], sizes = [1, 256], strides = [1, 1]} : vector<9x256xf32> to vector<1x256xf32>
    %157 = vector.broadcast %156 : vector<1x256xf32> to vector<4x256xf32>
    %158 = arith.mulf %155, %157 : vector<4x256xf32>
    %159 = arith.addf %151, %158 : vector<4x256xf32>
    %c1_i32_9 = arith.constant 1 : i32
    %160 = tpu.dynamic_rotate %136 by %c1_i32_9 dim 1 : vector<4x256xf32>, i32 -> vector<4x256xf32>
    %161 = vector.extract_strided_slice %4 {offsets = [0, 3], sizes = [4, 1], strides = [1, 1]} : vector<4x9xf32> to vector<4x1xf32>
    %162 = vector.broadcast %161 : vector<4x1xf32> to vector<4x256xf32>
    %163 = arith.mulf %160, %162 : vector<4x256xf32>
    %164 = vector.extract_strided_slice %1 {offsets = [3, 0], sizes = [1, 256], strides = [1, 1]} : vector<9x256xf32> to vector<1x256xf32>
    %165 = vector.broadcast %164 : vector<1x256xf32> to vector<4x256xf32>
    %166 = arith.mulf %163, %165 : vector<4x256xf32>
    %167 = arith.addf %159, %166 : vector<4x256xf32>
    %168 = vector.extract_strided_slice %4 {offsets = [0, 4], sizes = [4, 1], strides = [1, 1]} : vector<4x9xf32> to vector<4x1xf32>
    %169 = vector.broadcast %168 : vector<4x1xf32> to vector<4x256xf32>
    %170 = arith.mulf %136, %169 : vector<4x256xf32>
    %171 = arith.addf %167, %170 : vector<4x256xf32>
    %c255_i32_10 = arith.constant 255 : i32
    %172 = tpu.dynamic_rotate %136 by %c255_i32_10 dim 1 : vector<4x256xf32>, i32 -> vector<4x256xf32>
    %173 = vector.extract_strided_slice %4 {offsets = [0, 5], sizes = [4, 1], strides = [1, 1]} : vector<4x9xf32> to vector<4x1xf32>
    %174 = vector.broadcast %173 : vector<4x1xf32> to vector<4x256xf32>
    %175 = arith.mulf %172, %174 : vector<4x256xf32>
    %176 = vector.extract_strided_slice %1 {offsets = [5, 0], sizes = [1, 256], strides = [1, 1]} : vector<9x256xf32> to vector<1x256xf32>
    %177 = vector.broadcast %176 : vector<1x256xf32> to vector<4x256xf32>
    %178 = arith.mulf %175, %177 : vector<4x256xf32>
    %179 = arith.addf %171, %178 : vector<4x256xf32>
    %c241_i32_11 = arith.constant 241 : i32
    %180 = tpu.dynamic_rotate %136 by %c241_i32_11 dim 1 : vector<4x256xf32>, i32 -> vector<4x256xf32>
    %181 = vector.extract_strided_slice %4 {offsets = [0, 6], sizes = [4, 1], strides = [1, 1]} : vector<4x9xf32> to vector<4x1xf32>
    %182 = vector.broadcast %181 : vector<4x1xf32> to vector<4x256xf32>
    %183 = arith.mulf %180, %182 : vector<4x256xf32>
    %184 = vector.extract_strided_slice %1 {offsets = [6, 0], sizes = [1, 256], strides = [1, 1]} : vector<9x256xf32> to vector<1x256xf32>
    %185 = vector.broadcast %184 : vector<1x256xf32> to vector<4x256xf32>
    %186 = arith.mulf %183, %185 : vector<4x256xf32>
    %187 = arith.addf %179, %186 : vector<4x256xf32>
    %c240_i32_12 = arith.constant 240 : i32
    %188 = tpu.dynamic_rotate %136 by %c240_i32_12 dim 1 : vector<4x256xf32>, i32 -> vector<4x256xf32>
    %189 = vector.extract_strided_slice %4 {offsets = [0, 7], sizes = [4, 1], strides = [1, 1]} : vector<4x9xf32> to vector<4x1xf32>
    %190 = vector.broadcast %189 : vector<4x1xf32> to vector<4x256xf32>
    %191 = arith.mulf %188, %190 : vector<4x256xf32>
    %192 = vector.extract_strided_slice %1 {offsets = [7, 0], sizes = [1, 256], strides = [1, 1]} : vector<9x256xf32> to vector<1x256xf32>
    %193 = vector.broadcast %192 : vector<1x256xf32> to vector<4x256xf32>
    %194 = arith.mulf %191, %193 : vector<4x256xf32>
    %195 = arith.addf %187, %194 : vector<4x256xf32>
    %c239_i32_13 = arith.constant 239 : i32
    %196 = tpu.dynamic_rotate %136 by %c239_i32_13 dim 1 : vector<4x256xf32>, i32 -> vector<4x256xf32>
    %197 = vector.extract_strided_slice %4 {offsets = [0, 8], sizes = [4, 1], strides = [1, 1]} : vector<4x9xf32> to vector<4x1xf32>
    %198 = vector.broadcast %197 : vector<4x1xf32> to vector<4x256xf32>
    %199 = arith.mulf %196, %198 : vector<4x256xf32>
    %200 = vector.extract_strided_slice %1 {offsets = [8, 0], sizes = [1, 256], strides = [1, 1]} : vector<9x256xf32> to vector<1x256xf32>
    %201 = vector.broadcast %200 : vector<1x256xf32> to vector<4x256xf32>
    %202 = arith.mulf %199, %201 : vector<4x256xf32>
    %203 = arith.addf %195, %202 : vector<4x256xf32>
    %204 = vector.extract_strided_slice %203 {offsets = [0, 0], sizes = [2, 256], strides = [1, 1]} : vector<4x256xf32> to vector<2x256xf32>
    %205 = vector.extract_strided_slice %8 {offsets = [0, 0], sizes = [2, 1], strides = [1, 1]} : vector<2x2xf32> to vector<2x1xf32>
    %206 = vector.extract_strided_slice %204 {offsets = [0, 0], sizes = [1, 256], strides = [1, 1]} : vector<2x256xf32> to vector<1x256xf32>
    %207 = vector.broadcast %205 : vector<2x1xf32> to vector<2x256xf32>
    %208 = vector.broadcast %206 : vector<1x256xf32> to vector<2x256xf32>
    %209 = arith.mulf %207, %208 : vector<2x256xf32>
    %210 = vector.extract_strided_slice %8 {offsets = [0, 1], sizes = [2, 1], strides = [1, 1]} : vector<2x2xf32> to vector<2x1xf32>
    %211 = vector.extract_strided_slice %204 {offsets = [1, 0], sizes = [1, 256], strides = [1, 1]} : vector<2x256xf32> to vector<1x256xf32>
    %212 = vector.broadcast %210 : vector<2x1xf32> to vector<2x256xf32>
    %213 = vector.broadcast %211 : vector<1x256xf32> to vector<2x256xf32>
    %214 = arith.mulf %212, %213 : vector<2x256xf32>
    %215 = arith.addf %209, %214 : vector<2x256xf32>
    %216 = vector.broadcast %9 : vector<2x1xf32> to vector<2x256xf32>
    %217 = arith.addf %215, %216 : vector<2x256xf32>
    %cst_14 = arith.constant 0.000000e+00 : f32
    %218 = vector.broadcast %cst_14 : f32 to vector<2x256xf32>
    %219 = arith.maximumf %217, %218 : vector<2x256xf32>
    %220 = vector.extract_strided_slice %203 {offsets = [2, 0], sizes = [2, 256], strides = [1, 1]} : vector<4x256xf32> to vector<2x256xf32>
    %221 = vector.extract_strided_slice %8 {offsets = [0, 0], sizes = [2, 1], strides = [1, 1]} : vector<2x2xf32> to vector<2x1xf32>
    %222 = vector.extract_strided_slice %220 {offsets = [0, 0], sizes = [1, 256], strides = [1, 1]} : vector<2x256xf32> to vector<1x256xf32>
    %223 = vector.broadcast %221 : vector<2x1xf32> to vector<2x256xf32>
    %224 = vector.broadcast %222 : vector<1x256xf32> to vector<2x256xf32>
    %225 = arith.mulf %223, %224 : vector<2x256xf32>
    %226 = vector.extract_strided_slice %8 {offsets = [0, 1], sizes = [2, 1], strides = [1, 1]} : vector<2x2xf32> to vector<2x1xf32>
    %227 = vector.extract_strided_slice %220 {offsets = [1, 0], sizes = [1, 256], strides = [1, 1]} : vector<2x256xf32> to vector<1x256xf32>
    %228 = vector.broadcast %226 : vector<2x1xf32> to vector<2x256xf32>
    %229 = vector.broadcast %227 : vector<1x256xf32> to vector<2x256xf32>
    %230 = arith.mulf %228, %229 : vector<2x256xf32>
    %231 = arith.addf %225, %230 : vector<2x256xf32>
    %232 = vector.broadcast %9 : vector<2x1xf32> to vector<2x256xf32>
    %233 = arith.addf %231, %232 : vector<2x256xf32>
    %cst_15 = arith.constant 0.000000e+00 : f32
    %234 = vector.broadcast %cst_15 : f32 to vector<2x256xf32>
    %235 = arith.maximumf %233, %234 : vector<2x256xf32>
    %236 = tpu.concatenate %219, %235 in 0 : vector<2x256xf32>, vector<2x256xf32> -> vector<4x256xf32>
    %c17_i32_16 = arith.constant 17 : i32
    %237 = tpu.dynamic_rotate %236 by %c17_i32_16 dim 1 : vector<4x256xf32>, i32 -> vector<4x256xf32>
    %238 = vector.extract_strided_slice %5 {offsets = [0, 0], sizes = [4, 1], strides = [1, 1]} : vector<4x9xf32> to vector<4x1xf32>
    %239 = vector.broadcast %238 : vector<4x1xf32> to vector<4x256xf32>
    %240 = arith.mulf %237, %239 : vector<4x256xf32>
    %241 = vector.extract_strided_slice %1 {offsets = [0, 0], sizes = [1, 256], strides = [1, 1]} : vector<9x256xf32> to vector<1x256xf32>
    %242 = vector.broadcast %241 : vector<1x256xf32> to vector<4x256xf32>
    %243 = arith.mulf %240, %242 : vector<4x256xf32>
    %c16_i32_17 = arith.constant 16 : i32
    %244 = tpu.dynamic_rotate %236 by %c16_i32_17 dim 1 : vector<4x256xf32>, i32 -> vector<4x256xf32>
    %245 = vector.extract_strided_slice %5 {offsets = [0, 1], sizes = [4, 1], strides = [1, 1]} : vector<4x9xf32> to vector<4x1xf32>
    %246 = vector.broadcast %245 : vector<4x1xf32> to vector<4x256xf32>
    %247 = arith.mulf %244, %246 : vector<4x256xf32>
    %248 = vector.extract_strided_slice %1 {offsets = [1, 0], sizes = [1, 256], strides = [1, 1]} : vector<9x256xf32> to vector<1x256xf32>
    %249 = vector.broadcast %248 : vector<1x256xf32> to vector<4x256xf32>
    %250 = arith.mulf %247, %249 : vector<4x256xf32>
    %251 = arith.addf %243, %250 : vector<4x256xf32>
    %c15_i32_18 = arith.constant 15 : i32
    %252 = tpu.dynamic_rotate %236 by %c15_i32_18 dim 1 : vector<4x256xf32>, i32 -> vector<4x256xf32>
    %253 = vector.extract_strided_slice %5 {offsets = [0, 2], sizes = [4, 1], strides = [1, 1]} : vector<4x9xf32> to vector<4x1xf32>
    %254 = vector.broadcast %253 : vector<4x1xf32> to vector<4x256xf32>
    %255 = arith.mulf %252, %254 : vector<4x256xf32>
    %256 = vector.extract_strided_slice %1 {offsets = [2, 0], sizes = [1, 256], strides = [1, 1]} : vector<9x256xf32> to vector<1x256xf32>
    %257 = vector.broadcast %256 : vector<1x256xf32> to vector<4x256xf32>
    %258 = arith.mulf %255, %257 : vector<4x256xf32>
    %259 = arith.addf %251, %258 : vector<4x256xf32>
    %c1_i32_19 = arith.constant 1 : i32
    %260 = tpu.dynamic_rotate %236 by %c1_i32_19 dim 1 : vector<4x256xf32>, i32 -> vector<4x256xf32>
    %261 = vector.extract_strided_slice %5 {offsets = [0, 3], sizes = [4, 1], strides = [1, 1]} : vector<4x9xf32> to vector<4x1xf32>
    %262 = vector.broadcast %261 : vector<4x1xf32> to vector<4x256xf32>
    %263 = arith.mulf %260, %262 : vector<4x256xf32>
    %264 = vector.extract_strided_slice %1 {offsets = [3, 0], sizes = [1, 256], strides = [1, 1]} : vector<9x256xf32> to vector<1x256xf32>
    %265 = vector.broadcast %264 : vector<1x256xf32> to vector<4x256xf32>
    %266 = arith.mulf %263, %265 : vector<4x256xf32>
    %267 = arith.addf %259, %266 : vector<4x256xf32>
    %268 = vector.extract_strided_slice %5 {offsets = [0, 4], sizes = [4, 1], strides = [1, 1]} : vector<4x9xf32> to vector<4x1xf32>
    %269 = vector.broadcast %268 : vector<4x1xf32> to vector<4x256xf32>
    %270 = arith.mulf %236, %269 : vector<4x256xf32>
    %271 = arith.addf %267, %270 : vector<4x256xf32>
    %c255_i32_20 = arith.constant 255 : i32
    %272 = tpu.dynamic_rotate %236 by %c255_i32_20 dim 1 : vector<4x256xf32>, i32 -> vector<4x256xf32>
    %273 = vector.extract_strided_slice %5 {offsets = [0, 5], sizes = [4, 1], strides = [1, 1]} : vector<4x9xf32> to vector<4x1xf32>
    %274 = vector.broadcast %273 : vector<4x1xf32> to vector<4x256xf32>
    %275 = arith.mulf %272, %274 : vector<4x256xf32>
    %276 = vector.extract_strided_slice %1 {offsets = [5, 0], sizes = [1, 256], strides = [1, 1]} : vector<9x256xf32> to vector<1x256xf32>
    %277 = vector.broadcast %276 : vector<1x256xf32> to vector<4x256xf32>
    %278 = arith.mulf %275, %277 : vector<4x256xf32>
    %279 = arith.addf %271, %278 : vector<4x256xf32>
    %c241_i32_21 = arith.constant 241 : i32
    %280 = tpu.dynamic_rotate %236 by %c241_i32_21 dim 1 : vector<4x256xf32>, i32 -> vector<4x256xf32>
    %281 = vector.extract_strided_slice %5 {offsets = [0, 6], sizes = [4, 1], strides = [1, 1]} : vector<4x9xf32> to vector<4x1xf32>
    %282 = vector.broadcast %281 : vector<4x1xf32> to vector<4x256xf32>
    %283 = arith.mulf %280, %282 : vector<4x256xf32>
    %284 = vector.extract_strided_slice %1 {offsets = [6, 0], sizes = [1, 256], strides = [1, 1]} : vector<9x256xf32> to vector<1x256xf32>
    %285 = vector.broadcast %284 : vector<1x256xf32> to vector<4x256xf32>
    %286 = arith.mulf %283, %285 : vector<4x256xf32>
    %287 = arith.addf %279, %286 : vector<4x256xf32>
    %c240_i32_22 = arith.constant 240 : i32
    %288 = tpu.dynamic_rotate %236 by %c240_i32_22 dim 1 : vector<4x256xf32>, i32 -> vector<4x256xf32>
    %289 = vector.extract_strided_slice %5 {offsets = [0, 7], sizes = [4, 1], strides = [1, 1]} : vector<4x9xf32> to vector<4x1xf32>
    %290 = vector.broadcast %289 : vector<4x1xf32> to vector<4x256xf32>
    %291 = arith.mulf %288, %290 : vector<4x256xf32>
    %292 = vector.extract_strided_slice %1 {offsets = [7, 0], sizes = [1, 256], strides = [1, 1]} : vector<9x256xf32> to vector<1x256xf32>
    %293 = vector.broadcast %292 : vector<1x256xf32> to vector<4x256xf32>
    %294 = arith.mulf %291, %293 : vector<4x256xf32>
    %295 = arith.addf %287, %294 : vector<4x256xf32>
    %c239_i32_23 = arith.constant 239 : i32
    %296 = tpu.dynamic_rotate %236 by %c239_i32_23 dim 1 : vector<4x256xf32>, i32 -> vector<4x256xf32>
    %297 = vector.extract_strided_slice %5 {offsets = [0, 8], sizes = [4, 1], strides = [1, 1]} : vector<4x9xf32> to vector<4x1xf32>
    %298 = vector.broadcast %297 : vector<4x1xf32> to vector<4x256xf32>
    %299 = arith.mulf %296, %298 : vector<4x256xf32>
    %300 = vector.extract_strided_slice %1 {offsets = [8, 0], sizes = [1, 256], strides = [1, 1]} : vector<9x256xf32> to vector<1x256xf32>
    %301 = vector.broadcast %300 : vector<1x256xf32> to vector<4x256xf32>
    %302 = arith.mulf %299, %301 : vector<4x256xf32>
    %303 = arith.addf %295, %302 : vector<4x256xf32>
    %304 = vector.extract_strided_slice %303 {offsets = [0, 0], sizes = [2, 256], strides = [1, 1]} : vector<4x256xf32> to vector<2x256xf32>
    %305 = vector.extract_strided_slice %10 {offsets = [0, 0], sizes = [8, 1], strides = [1, 1]} : vector<8x2xf32> to vector<8x1xf32>
    %306 = vector.extract_strided_slice %304 {offsets = [0, 0], sizes = [1, 256], strides = [1, 1]} : vector<2x256xf32> to vector<1x256xf32>
    %307 = vector.broadcast %305 : vector<8x1xf32> to vector<8x256xf32>
    %308 = vector.broadcast %306 : vector<1x256xf32> to vector<8x256xf32>
    %309 = arith.mulf %307, %308 : vector<8x256xf32>
    %310 = vector.extract_strided_slice %10 {offsets = [0, 1], sizes = [8, 1], strides = [1, 1]} : vector<8x2xf32> to vector<8x1xf32>
    %311 = vector.extract_strided_slice %304 {offsets = [1, 0], sizes = [1, 256], strides = [1, 1]} : vector<2x256xf32> to vector<1x256xf32>
    %312 = vector.broadcast %310 : vector<8x1xf32> to vector<8x256xf32>
    %313 = vector.broadcast %311 : vector<1x256xf32> to vector<8x256xf32>
    %314 = arith.mulf %312, %313 : vector<8x256xf32>
    %315 = arith.addf %309, %314 : vector<8x256xf32>
    %316 = vector.broadcast %11 : vector<8x1xf32> to vector<8x256xf32>
    %317 = arith.addf %315, %316 : vector<8x256xf32>
    %cst_24 = arith.constant 0.000000e+00 : f32
    %318 = vector.broadcast %cst_24 : f32 to vector<8x256xf32>
    %319 = arith.maximumf %317, %318 : vector<8x256xf32>
    %320 = vector.extract_strided_slice %303 {offsets = [2, 0], sizes = [2, 256], strides = [1, 1]} : vector<4x256xf32> to vector<2x256xf32>
    %321 = vector.extract_strided_slice %10 {offsets = [0, 0], sizes = [8, 1], strides = [1, 1]} : vector<8x2xf32> to vector<8x1xf32>
    %322 = vector.extract_strided_slice %320 {offsets = [0, 0], sizes = [1, 256], strides = [1, 1]} : vector<2x256xf32> to vector<1x256xf32>
    %323 = vector.broadcast %321 : vector<8x1xf32> to vector<8x256xf32>
    %324 = vector.broadcast %322 : vector<1x256xf32> to vector<8x256xf32>
    %325 = arith.mulf %323, %324 : vector<8x256xf32>
    %326 = vector.extract_strided_slice %10 {offsets = [0, 1], sizes = [8, 1], strides = [1, 1]} : vector<8x2xf32> to vector<8x1xf32>
    %327 = vector.extract_strided_slice %320 {offsets = [1, 0], sizes = [1, 256], strides = [1, 1]} : vector<2x256xf32> to vector<1x256xf32>
    %328 = vector.broadcast %326 : vector<8x1xf32> to vector<8x256xf32>
    %329 = vector.broadcast %327 : vector<1x256xf32> to vector<8x256xf32>
    %330 = arith.mulf %328, %329 : vector<8x256xf32>
    %331 = arith.addf %325, %330 : vector<8x256xf32>
    %332 = vector.broadcast %11 : vector<8x1xf32> to vector<8x256xf32>
    %333 = arith.addf %331, %332 : vector<8x256xf32>
    %cst_25 = arith.constant 0.000000e+00 : f32
    %334 = vector.broadcast %cst_25 : f32 to vector<8x256xf32>
    %335 = arith.maximumf %333, %334 : vector<8x256xf32>
    %336 = tpu.concatenate %319, %335 in 0 : vector<8x256xf32>, vector<8x256xf32> -> vector<16x256xf32>
    %337 = vector.extract_strided_slice %0 {offsets = [0, 0], sizes = [4, 256], strides = [1, 1]} : vector<8x256xf32> to vector<4x256xf32>
    %338 = vector.extract_strided_slice %336 {offsets = [0, 0], sizes = [8, 256], strides = [1, 1]} : vector<16x256xf32> to vector<8x256xf32>
    %339 = vector.extract_strided_slice %12 {offsets = [0, 0], sizes = [8, 1], strides = [1, 1]} : vector<8x4xf32> to vector<8x1xf32>
    %340 = vector.extract_strided_slice %337 {offsets = [0, 0], sizes = [1, 256], strides = [1, 1]} : vector<4x256xf32> to vector<1x256xf32>
    %341 = vector.broadcast %339 : vector<8x1xf32> to vector<8x256xf32>
    %342 = vector.broadcast %340 : vector<1x256xf32> to vector<8x256xf32>
    %343 = arith.mulf %341, %342 : vector<8x256xf32>
    %344 = arith.addf %338, %343 : vector<8x256xf32>
    %345 = vector.extract_strided_slice %12 {offsets = [0, 1], sizes = [8, 1], strides = [1, 1]} : vector<8x4xf32> to vector<8x1xf32>
    %346 = vector.extract_strided_slice %337 {offsets = [1, 0], sizes = [1, 256], strides = [1, 1]} : vector<4x256xf32> to vector<1x256xf32>
    %347 = vector.broadcast %345 : vector<8x1xf32> to vector<8x256xf32>
    %348 = vector.broadcast %346 : vector<1x256xf32> to vector<8x256xf32>
    %349 = arith.mulf %347, %348 : vector<8x256xf32>
    %350 = arith.addf %344, %349 : vector<8x256xf32>
    %351 = vector.extract_strided_slice %12 {offsets = [0, 2], sizes = [8, 1], strides = [1, 1]} : vector<8x4xf32> to vector<8x1xf32>
    %352 = vector.extract_strided_slice %337 {offsets = [2, 0], sizes = [1, 256], strides = [1, 1]} : vector<4x256xf32> to vector<1x256xf32>
    %353 = vector.broadcast %351 : vector<8x1xf32> to vector<8x256xf32>
    %354 = vector.broadcast %352 : vector<1x256xf32> to vector<8x256xf32>
    %355 = arith.mulf %353, %354 : vector<8x256xf32>
    %356 = arith.addf %350, %355 : vector<8x256xf32>
    %357 = vector.extract_strided_slice %12 {offsets = [0, 3], sizes = [8, 1], strides = [1, 1]} : vector<8x4xf32> to vector<8x1xf32>
    %358 = vector.extract_strided_slice %337 {offsets = [3, 0], sizes = [1, 256], strides = [1, 1]} : vector<4x256xf32> to vector<1x256xf32>
    %359 = vector.broadcast %357 : vector<8x1xf32> to vector<8x256xf32>
    %360 = vector.broadcast %358 : vector<1x256xf32> to vector<8x256xf32>
    %361 = arith.mulf %359, %360 : vector<8x256xf32>
    %362 = arith.addf %356, %361 : vector<8x256xf32>
    %363 = vector.extract_strided_slice %0 {offsets = [4, 0], sizes = [4, 256], strides = [1, 1]} : vector<8x256xf32> to vector<4x256xf32>
    %364 = vector.extract_strided_slice %336 {offsets = [8, 0], sizes = [8, 256], strides = [1, 1]} : vector<16x256xf32> to vector<8x256xf32>
    %365 = vector.extract_strided_slice %12 {offsets = [0, 0], sizes = [8, 1], strides = [1, 1]} : vector<8x4xf32> to vector<8x1xf32>
    %366 = vector.extract_strided_slice %363 {offsets = [0, 0], sizes = [1, 256], strides = [1, 1]} : vector<4x256xf32> to vector<1x256xf32>
    %367 = vector.broadcast %365 : vector<8x1xf32> to vector<8x256xf32>
    %368 = vector.broadcast %366 : vector<1x256xf32> to vector<8x256xf32>
    %369 = arith.mulf %367, %368 : vector<8x256xf32>
    %370 = arith.addf %364, %369 : vector<8x256xf32>
    %371 = vector.extract_strided_slice %12 {offsets = [0, 1], sizes = [8, 1], strides = [1, 1]} : vector<8x4xf32> to vector<8x1xf32>
    %372 = vector.extract_strided_slice %363 {offsets = [1, 0], sizes = [1, 256], strides = [1, 1]} : vector<4x256xf32> to vector<1x256xf32>
    %373 = vector.broadcast %371 : vector<8x1xf32> to vector<8x256xf32>
    %374 = vector.broadcast %372 : vector<1x256xf32> to vector<8x256xf32>
    %375 = arith.mulf %373, %374 : vector<8x256xf32>
    %376 = arith.addf %370, %375 : vector<8x256xf32>
    %377 = vector.extract_strided_slice %12 {offsets = [0, 2], sizes = [8, 1], strides = [1, 1]} : vector<8x4xf32> to vector<8x1xf32>
    %378 = vector.extract_strided_slice %363 {offsets = [2, 0], sizes = [1, 256], strides = [1, 1]} : vector<4x256xf32> to vector<1x256xf32>
    %379 = vector.broadcast %377 : vector<8x1xf32> to vector<8x256xf32>
    %380 = vector.broadcast %378 : vector<1x256xf32> to vector<8x256xf32>
    %381 = arith.mulf %379, %380 : vector<8x256xf32>
    %382 = arith.addf %376, %381 : vector<8x256xf32>
    %383 = vector.extract_strided_slice %12 {offsets = [0, 3], sizes = [8, 1], strides = [1, 1]} : vector<8x4xf32> to vector<8x1xf32>
    %384 = vector.extract_strided_slice %363 {offsets = [3, 0], sizes = [1, 256], strides = [1, 1]} : vector<4x256xf32> to vector<1x256xf32>
    %385 = vector.broadcast %383 : vector<8x1xf32> to vector<8x256xf32>
    %386 = vector.broadcast %384 : vector<1x256xf32> to vector<8x256xf32>
    %387 = arith.mulf %385, %386 : vector<8x256xf32>
    %388 = arith.addf %382, %387 : vector<8x256xf32>
    %389 = tpu.concatenate %362, %388 in 0 : vector<8x256xf32>, vector<8x256xf32> -> vector<16x256xf32>
    %c0_26 = arith.constant 0 : index
    %c0_27 = arith.constant 0 : index
    %390 = vector.load %arg4[%c0_26, %c0_27] : memref<16x256xf32, #tpu.memory_space<vmem>>, vector<16x256xf32>
    tpu.vector_store %arg4[%c0_26, %c0_27], %389 {strides = array<i32>} : memref<16x256xf32, #tpu.memory_space<vmem>>, vector<16x256xf32>,
    return
  }
  func.func @transform_0(%arg0: i32) -> (i32, i32) {
    %c0_i32 = arith.constant 0 : i32
    %c0_i32_0 = arith.constant 0 : i32
    return %arg0, %c0_i32 : i32, i32
  }
  func.func @transform_1(%arg0: i32) -> (i32, i32) {
    %c0_i32 = arith.constant 0 : i32
    %c0_i32_0 = arith.constant 0 : i32
    %c0_i32_1 = arith.constant 0 : i32
    return %c0_i32, %c0_i32_0 : i32, i32
  }
  func.func @transform_2(%arg0: i32) -> (i32, i32) {
    %c0_i32 = arith.constant 0 : i32
    %c0_i32_0 = arith.constant 0 : i32
    %c0_i32_1 = arith.constant 0 : i32
    return %c0_i32, %c0_i32_0 : i32, i32
  }
  func.func @transform_3(%arg0: i32) -> (i32, i32) {
    %c0_i32 = arith.constant 0 : i32
    %c0_i32_0 = arith.constant 0 : i32
    return %arg0, %c0_i32 : i32, i32
  }
}

</mosaic_0001>

<llo_original>
// kernel: tpu_custom_call.1
$region0: #{tpu_custom_call.1}
  #allocation0 [shape = 'u32[]', space=smem, size = 0x4, offset = 0x4, fixed_abs, tag = 'smem constant byte address 0x4 - core index']
  #allocation1 [shape = 'u32[144,128]{1,0:T(1,128)}', space=vmem, size = 0x12000, scoped, tag = 'internal scratch']
  %s0 = inlined_call_operand.vmem [shape: f32[8,256], index: 0, kind: input, shape index: {}]
  %s1 = inlined_call_operand.vmem [shape: f32[9,256], index: 1, kind: input, shape index: {}]
  %s2 = inlined_call_operand.vmem [shape: f32[36,9], index: 2, kind: input, shape index: {}]
  %s3 = inlined_call_operand.hbm [shape: f32[16,256], index: 3, kind: output, shape index: {}]
  %s4 = sld [smem:[#allocation0]]
  $region22: #{tpu_custom_call.1} parent=0
    _
  %s6 = ssub.s32 1, %s4
  %s7 = scalar_select 0, %s6, %s4
  $region1: #{tpu_custom_call.1} parent=0
    #allocation2 [shape = 'u8[16384]{0}', space=vmem, size = 0x4000, scoped, tag = 'output window, operand 0, single buffered']
    #allocation3 [shape = 's32[1]{0}', space=sflag, size = 0x4, scoped, tag = 'scoped memory for tpu_custom_call.1']
    %8 = vsyncpa [#allocation3], 0
    // Predicated region
    $region2: #{tpu_custom_call.1} parent=1 // pred_check
      _
    $region3: #{tpu_custom_call.1} parent=1 // pred_check_branch
      %10 = sbr.rel (0) target = $region5
    $region4: #{tpu_custom_call.1} parent=1 // pred_region
      _
    $region5: #{tpu_custom_call.1} parent=1 // pred_fallthru
      _
    // Predicated region
    $region6: #{tpu_custom_call.1} parent=1 // pred_check
      _
    $region7: #{tpu_custom_call.1} parent=1 // pred_check_branch
      %12 = sbr.rel (0) target = $region9
    $region8: #{tpu_custom_call.1} parent=1 // pred_region
      _
    $region9: #{tpu_custom_call.1} parent=1 // pred_fallthru
      _
    // Predicated region
    $region10: #{tpu_custom_call.1} parent=1 // pred_check
      _
    $region11: #{tpu_custom_call.1} parent=1 // pred_check_branch
      %14 = sbr.rel (0) target = $region13
    $region12: #{tpu_custom_call.1} parent=1 // pred_region
      _
    $region13: #{tpu_custom_call.1} parent=1 // pred_fallthru
      _
    %v15 = vld [vmem:[%s0] sm:$0xff]
    %v16 = vld [vmem:[%s0 + $0x8] sm:$0xff]
    %v17 = vld [vmem:[%s1] sm:$0xff]
    %v18 = vld [vmem:[%s1 + $0x8] sm:$0xff]
    %v19 = vld [vmem:[%s1 + $0x10] sm:$0x1]
    %v20 = vld [vmem:[%s1 + $0x18] sm:$0x1]
    %v21 = vld [vmem:[%s2] sm:$0xff]
    %v22 = vld [vmem:[%s2 + $0x8] sm:$0xff]
    %v23 = vld [vmem:[%s2 + $0x10] sm:$0xff]
    %v24 = vld [vmem:[%s2 + $0x18] sm:$0xff]
    %v25 = vld [vmem:[%s2 + $0x20] sm:$0xf]
    %26 = vrot.lane.b32.xlu0 %v15, 17
    %v27 = vpop.permute.xlu0 %26
    %28 = vrot.lane.b32.xlu0 %v16, 17
    %v29 = vpop.permute.xlu0 %28
    %v30 = vlaneseq
    %v31 = vand.u32 %v30, 127
    %vm32 = vcmp.lt.s32.totalorder %v31, 17
    %v33 = vsel %vm32, %v27, %v29
    %v34 = vsel %vm32, %v29, %v27
    %36 = vset.pattern.permute.xlu0 0
    %37 = vperm.xlu0 %36, %v21
    %v38 = vpop.permute.xlu0 %37
    %v40 = vmul.f32 %v34, %v38
    %v41 = vmul.f32 %v33, %v38
    %v42 = vlaneseq
    %v43 = vshrl.u32 %v42, 7
    %v44 = vsub.s32 0, %v43
    %v45 = vrot.slane %v17, %v44
    %v46 = vlaneseq
    %v47 = vshrl.u32 %v46, 7
    %v48 = vsub.s32 0, %v47
    %v49 = vrot.slane %v18, %v48
    %v50 = vmul.f32 %v40, %v45
    %v51 = vmul.f32 %v41, %v49
    %52 = vrot.lane.b32.xlu0 %v15, 16
    %v53 = vpop.permute.xlu0 %52
    %54 = vrot.lane.b32.xlu0 %v16, 16
    %v55 = vpop.permute.xlu0 %54
    %vm56 = vcmp.lt.s32.totalorder %v31, 16
    %v57 = vsel %vm56, %v53, %v55
    %v58 = vsel %vm56, %v55, %v53
    %59 = vset.pattern.permute.xlu0 1
    %60 = vperm.xlu0 %59, %v21
    %v61 = vpop.permute.xlu0 %60
    %v63 = vmul.f32 %v58, %v61
    %v64 = vmul.f32 %v57, %v61
    %v65 = vlaneseq
    %v66 = vshrl.u32 %v65, 7
    %v67 = vsub.s32 1, %v66
    %v68 = vrot.slane %v17, %v67
    %v69 = vlaneseq
    %v70 = vshrl.u32 %v69, 7
    %v71 = vsub.s32 1, %v70
    %v72 = vrot.slane %v18, %v71
    %v73 = vmul.f32 %v63, %v68
    %v74 = vmul.f32 %v64, %v72
    %v75 = vadd.f32 %v50, %v73
    %v76 = vadd.f32 %v51, %v74
    %77 = vrot.lane.b32.xlu0 %v15, 15
    %v78 = vpop.permute.xlu0 %77
    %79 = vrot.lane.b32.xlu0 %v16, 15
    %v80 = vpop.permute.xlu0 %79
    %vm81 = vcmp.lt.s32.totalorder %v31, 15
    %v82 = vsel %vm81, %v78, %v80
    %v83 = vsel %vm81, %v80, %v78
    %84 = vset.pattern.permute.xlu0 2
    %85 = vperm.xlu0 %84, %v21
    %v86 = vpop.permute.xlu0 %85
    %v88 = vmul.f32 %v83, %v86
    %v89 = vmul.f32 %v82, %v86
    %v90 = vlaneseq
    %v91 = vshrl.u32 %v90, 7
    %v92 = vsub.s32 2, %v91
    %v93 = vrot.slane %v17, %v92
    %v94 = vlaneseq
    %v95 = vshrl.u32 %v94, 7
    %v96 = vsub.s32 2, %v95
    %v97 = vrot.slane %v18, %v96
    %v98 = vmul.f32 %v88, %v93
    %v99 = vmul.f32 %v89, %v97
    %v100 = vadd.f32 %v75, %v98
    %v101 = vadd.f32 %v76, %v99
    %102 = vrot.lane.b32.xlu0 %v15, 1
    %v103 = vpop.permute.xlu0 %102
    %104 = vrot.lane.b32.xlu0 %v16, 1
    %v105 = vpop.permute.xlu0 %104
    %vm106 = vcmp.lt.s32.totalorder %v31, 1
    %v107 = vsel %vm106, %v103, %v105
    %v108 = vsel %vm106, %v105, %v103
    %109 = vset.pattern.permute.xlu0 3
    %110 = vperm.xlu0 %109, %v21
    %v111 = vpop.permute.xlu0 %110
    %v113 = vmul.f32 %v108, %v111
    %v114 = vmul.f32 %v107, %v111
    %v115 = vlaneseq
    %v116 = vshrl.u32 %v115, 7
    %v117 = vsub.s32 3, %v116
    %v118 = vrot.slane %v17, %v117
    %v119 = vlaneseq
    %v120 = vshrl.u32 %v119, 7
    %v121 = vsub.s32 3, %v120
    %v122 = vrot.slane %v18, %v121
    %v123 = vmul.f32 %v113, %v118
    %v124 = vmul.f32 %v114, %v122
    %v125 = vadd.f32 %v100, %v123
    %v126 = vadd.f32 %v101, %v124
    %127 = vset.pattern.permute.xlu0 4
    %128 = vperm.xlu0 %127, %v21
    %v129 = vpop.permute.xlu0 %128
    %v131 = vmul.f32 %v15, %v129
    %v132 = vmul.f32 %v16, %v129
    %v133 = vadd.f32 %v125, %v131
    %v134 = vadd.f32 %v126, %v132
    %135 = vrot.lane.b32.xlu0 %v15, 127
    %v136 = vpop.permute.xlu0 %135
    %137 = vrot.lane.b32.xlu0 %v16, 127
    %v138 = vpop.permute.xlu0 %137
    %vm139 = vcmp.lt.s32.totalorder %v31, 127
    %v140 = vsel %vm139, %v136, %v138
    %v141 = vsel %vm139, %v138, %v136
    %142 = vset.pattern.permute.xlu0 5
    %143 = vperm.xlu0 %142, %v21
    %v144 = vpop.permute.xlu0 %143
    %v146 = vmul.f32 %v140, %v144
    %v147 = vmul.f32 %v141, %v144
    %v148 = vlaneseq
    %v149 = vshrl.u32 %v148, 7
    %v150 = vsub.s32 5, %v149
    %v151 = vrot.slane %v17, %v150
    %v152 = vlaneseq
    %v153 = vshrl.u32 %v152, 7
    %v154 = vsub.s32 5, %v153
    %v155 = vrot.slane %v18, %v154
    %v156 = vmul.f32 %v146, %v151
    %v157 = vmul.f32 %v147, %v155
    %v158 = vadd.f32 %v133, %v156
    %v159 = vadd.f32 %v134, %v157
    %160 = vrot.lane.b32.xlu0 %v15, 113
    %v161 = vpop.permute.xlu0 %160
    %162 = vrot.lane.b32.xlu0 %v16, 113
    %v163 = vpop.permute.xlu0 %162
    %vm164 = vcmp.lt.s32.totalorder %v31, 113
    %v165 = vsel %vm164, %v161, %v163
    %v166 = vsel %vm164, %v163, %v161
    %167 = vset.pattern.permute.xlu0 6
    %168 = vperm.xlu0 %167, %v21
    %v169 = vpop.permute.xlu0 %168
    %v171 = vmul.f32 %v165, %v169
    %v172 = vmul.f32 %v166, %v169
    %v173 = vlaneseq
    %v174 = vshrl.u32 %v173, 7
    %v175 = vsub.s32 6, %v174
    %v176 = vrot.slane %v17, %v175
    %v177 = vlaneseq
    %v178 = vshrl.u32 %v177, 7
    %v179 = vsub.s32 6, %v178
    %v180 = vrot.slane %v18, %v179
    %v181 = vmul.f32 %v171, %v176
    %v182 = vmul.f32 %v172, %v180
    %v183 = vadd.f32 %v158, %v181
    %v184 = vadd.f32 %v159, %v182
    %185 = vrot.lane.b32.xlu0 %v15, 112
    %v186 = vpop.permute.xlu0 %185
    %187 = vrot.lane.b32.xlu0 %v16, 112
    %v188 = vpop.permute.xlu0 %187
    %vm189 = vcmp.lt.s32.totalorder %v31, 112
    %v190 = vsel %vm189, %v186, %v188
    %v191 = vsel %vm189, %v188, %v186
    %192 = vset.pattern.permute.xlu0 7
    %193 = vperm.xlu0 %192, %v21
    %v194 = vpop.permute.xlu0 %193
    %v196 = vmul.f32 %v190, %v194
    %v197 = vmul.f32 %v191, %v194
    %v198 = vlaneseq
    %v199 = vshrl.u32 %v198, 7
    %v200 = vsub.s32 7, %v199
    %v201 = vrot.slane %v17, %v200
    %v202 = vlaneseq
    %v203 = vshrl.u32 %v202, 7
    %v204 = vsub.s32 7, %v203
    %v205 = vrot.slane %v18, %v204
    %v206 = vmul.f32 %v196, %v201
    %v207 = vmul.f32 %v197, %v205
    %v208 = vadd.f32 %v183, %v206
    %v209 = vadd.f32 %v184, %v207
    %210 = vrot.lane.b32.xlu0 %v15, 111
    %v211 = vpop.permute.xlu0 %210
    %212 = vrot.lane.b32.xlu0 %v16, 111
    %v213 = vpop.permute.xlu0 %212
    %vm214 = vcmp.lt.s32.totalorder %v31, 111
    %v215 = vsel %vm214, %v211, %v213
    %v216 = vsel %vm214, %v213, %v211
    %217 = vset.pattern.permute.xlu0 8
    %218 = vperm.xlu0 %217, %v21
    %v219 = vpop.permute.xlu0 %218
    %v221 = vmul.f32 %v215, %v219
    %v222 = vmul.f32 %v216, %v219
    %v223 = vlaneseq
    %v224 = vshrl.u32 %v223, 7
    %v225 = vsub.s32 0, %v224
    %v226 = vrot.slane %v19, %v225
    %v227 = vlaneseq
    %v228 = vshrl.u32 %v227, 7
    %v229 = vsub.s32 0, %v228
    %v230 = vrot.slane %v20, %v229
    %v231 = vmul.f32 %v221, %v226
    %v232 = vmul.f32 %v222, %v230
    %v233 = vadd.f32 %v208, %v231
    %v234 = vadd.f32 %v209, %v232
    %236 = vset.pattern.permute.xlu0 0
    %237 = vperm.xlu0 %236, %v23
    %v238 = vpop.permute.xlu0 %237
    %v240 = vlaneseq
    %v241 = vshrl.u32 %v240, 7
    %v242 = vsub.s32 0, %v241
    %v243 = vrot.slane %v233, %v242
    %v244 = vlaneseq
    %v245 = vshrl.u32 %v244, 7
    %v246 = vsub.s32 0, %v245
    %v247 = vrot.slane %v234, %v246
    %v248 = vmul.f32 %v238, %v243
    %v249 = vmul.f32 %v238, %v247
    %250 = vset.pattern.permute.xlu0 1
    %251 = vperm.xlu0 %250, %v23
    %v252 = vpop.permute.xlu0 %251
    %v254 = vlaneseq
    %v255 = vshrl.u32 %v254, 7
    %v256 = vsub.s32 1, %v255
    %v257 = vrot.slane %v233, %v256
    %v258 = vlaneseq
    %v259 = vshrl.u32 %v258, 7
    %v260 = vsub.s32 1, %v259
    %v261 = vrot.slane %v234, %v260
    %v262 = vmul.f32 %v252, %v257
    %v263 = vmul.f32 %v252, %v261
    %v264 = vadd.f32 %v248, %v262
    %v265 = vadd.f32 %v249, %v263
    %266 = vset.pattern.permute.xlu0 2
    %267 = vperm.xlu0 %266, %v23
    %v268 = vpop.permute.xlu0 %267
    %v270 = vlaneseq
    %v271 = vshrl.u32 %v270, 7
    %v272 = vsub.s32 2, %v271
    %v273 = vrot.slane %v233, %v272
    %v274 = vlaneseq
    %v275 = vshrl.u32 %v274, 7
    %v276 = vsub.s32 2, %v275
    %v277 = vrot.slane %v234, %v276
    %v278 = vmul.f32 %v268, %v273
    %v279 = vmul.f32 %v268, %v277
    %v280 = vadd.f32 %v264, %v278
    %v281 = vadd.f32 %v265, %v279
    %282 = vset.pattern.permute.xlu0 3
    %283 = vperm.xlu0 %282, %v23
    %v284 = vpop.permute.xlu0 %283
    %v286 = vlaneseq
    %v287 = vshrl.u32 %v286, 7
    %v288 = vsub.s32 3, %v287
    %v289 = vrot.slane %v233, %v288
    %v290 = vlaneseq
    %v291 = vshrl.u32 %v290, 7
    %v292 = vsub.s32 3, %v291
    %v293 = vrot.slane %v234, %v292
    %v294 = vmul.f32 %v284, %v289
    %v295 = vmul.f32 %v284, %v293
    %v296 = vadd.f32 %v280, %v294
    %v297 = vadd.f32 %v281, %v295
    %298 = vset.pattern.permute.xlu0 4
    %299 = vperm.xlu0 %298, %v23
    %v300 = vpop.permute.xlu0 %299
    %v302 = vadd.f32 %v296, %v300
    %v303 = vadd.f32 %v297, %v300
    %v304 = vmax.f32 %v302, 0.0
    %v305 = vmax.f32 %v303, 0.0
    %v306 = vlaneseq
    %v307 = vshrl.u32 %v306, 7
    %v308 = vsub.s32 4, %v307
    %v309 = vrot.slane %v233, %v308
    %v310 = vlaneseq
    %v311 = vshrl.u32 %v310, 7
    %v312 = vsub.s32 4, %v311
    %v313 = vrot.slane %v234, %v312
    %v314 = vmul.f32 %v238, %v309
    %v315 = vmul.f32 %v238, %v313
    %v316 = vlaneseq
    %v317 = vshrl.u32 %v316, 7
    %v318 = vsub.s32 5, %v317
    %v319 = vrot.slane %v233, %v318
    %v320 = vlaneseq
    %v321 = vshrl.u32 %v320, 7
    %v322 = vsub.s32 5, %v321
    %v323 = vrot.slane %v234, %v322
    %v324 = vmul.f32 %v252, %v319
    %v325 = vmul.f32 %v252, %v323
    %v326 = vadd.f32 %v314, %v324
    %v327 = vadd.f32 %v315, %v325
    %v328 = vlaneseq
    %v329 = vshrl.u32 %v328, 7
    %v330 = vsub.s32 6, %v329
    %v331 = vrot.slane %v233, %v330
    %v332 = vlaneseq
    %v333 = vshrl.u32 %v332, 7
    %v334 = vsub.s32 6, %v333
    %v335 = vrot.slane %v234, %v334
    %v336 = vmul.f32 %v268, %v331
    %v337 = vmul.f32 %v268, %v335
    %v338 = vadd.f32 %v326, %v336
    %v339 = vadd.f32 %v327, %v337
    %v340 = vlaneseq
    %v341 = vshrl.u32 %v340, 7
    %v342 = vsub.s32 7, %v341
    %v343 = vrot.slane %v233, %v342
    %v344 = vlaneseq
    %v345 = vshrl.u32 %v344, 7
    %v346 = vsub.s32 7, %v345
    %v347 = vrot.slane %v234, %v346
    %v348 = vmul.f32 %v284, %v343
    %v349 = vmul.f32 %v284, %v347
    %v350 = vadd.f32 %v338, %v348
    %v351 = vadd.f32 %v339, %v349
    %v352 = vadd.f32 %v350, %v300
    %v353 = vadd.f32 %v351, %v300
    %v354 = vmax.f32 %v352, 0.0
    %v355 = vmax.f32 %v353, 0.0
    %v358 = vrot.slane %v354, 6
    %v359 = vrot.slane %v355, 6
    %vm362 = vcmask 1041408
    %v363 = vsel %vm362, %v304, %v358
    %v364 = vsel %vm362, %v305, %v359
    %365 = vrot.lane.b32.xlu0 %v363, 17
    %v366 = vpop.permute.xlu0 %365
    %367 = vrot.lane.b32.xlu0 %v364, 17
    %v368 = vpop.permute.xlu0 %367
    %v369 = vsel %vm32, %v366, %v368
    %v370 = vsel %vm32, %v368, %v366
    %372 = vset.pattern.permute.xlu0 0
    %373 = vperm.xlu0 %372, %v22
    %v374 = vpop.permute.xlu0 %373
    %v376 = vmul.f32 %v370, %v374
    %v377 = vmul.f32 %v369, %v374
    %v378 = vmul.f32 %v376, %v45
    %v379 = vmul.f32 %v377, %v49
    %380 = vrot.lane.b32.xlu0 %v363, 16
    %v381 = vpop.permute.xlu0 %380
    %382 = vrot.lane.b32.xlu0 %v364, 16
    %v383 = vpop.permute.xlu0 %382
    %v384 = vsel %vm56, %v381, %v383
    %v385 = vsel %vm56, %v383, %v381
    %386 = vset.pattern.permute.xlu0 1
    %387 = vperm.xlu0 %386, %v22
    %v388 = vpop.permute.xlu0 %387
    %v390 = vmul.f32 %v385, %v388
    %v391 = vmul.f32 %v384, %v388
    %v392 = vmul.f32 %v390, %v68
    %v393 = vmul.f32 %v391, %v72
    %v394 = vadd.f32 %v378, %v392
    %v395 = vadd.f32 %v379, %v393
    %396 = vrot.lane.b32.xlu0 %v363, 15
    %v397 = vpop.permute.xlu0 %396
    %398 = vrot.lane.b32.xlu0 %v364, 15
    %v399 = vpop.permute.xlu0 %398
    %v400 = vsel %vm81, %v397, %v399
    %v401 = vsel %vm81, %v399, %v397
    %402 = vset.pattern.permute.xlu0 2
    %403 = vperm.xlu0 %402, %v22
    %v404 = vpop.permute.xlu0 %403
    %v406 = vmul.f32 %v401, %v404
    %v407 = vmul.f32 %v400, %v404
    %v408 = vmul.f32 %v406, %v93
    %v409 = vmul.f32 %v407, %v97
    %v410 = vadd.f32 %v394, %v408
    %v411 = vadd.f32 %v395, %v409
    %412 = vrot.lane.b32.xlu0 %v363, 1
    %v413 = vpop.permute.xlu0 %412
    %414 = vrot.lane.b32.xlu0 %v364, 1
    %v415 = vpop.permute.xlu0 %414
    %v416 = vsel %vm106, %v413, %v415
    %v417 = vsel %vm106, %v415, %v413
    %418 = vset.pattern.permute.xlu0 3
    %419 = vperm.xlu0 %418, %v22
    %v420 = vpop.permute.xlu0 %419
    %v422 = vmul.f32 %v417, %v420
    %v423 = vmul.f32 %v416, %v420
    %v424 = vmul.f32 %v422, %v118
    %v425 = vmul.f32 %v423, %v122
    %v426 = vadd.f32 %v410, %v424
    %v427 = vadd.f32 %v411, %v425
    %428 = vset.pattern.permute.xlu0 4
    %429 = vperm.xlu0 %428, %v22
    %v430 = vpop.permute.xlu0 %429
    %v432 = vmul.f32 %v363, %v430
    %v433 = vmul.f32 %v364, %v430
    %v434 = vadd.f32 %v426, %v432
    %v435 = vadd.f32 %v427, %v433
    %436 = vrot.lane.b32.xlu0 %v363, 127
    %v437 = vpop.permute.xlu0 %436
    %438 = vrot.lane.b32.xlu0 %v364, 127
    %v439 = vpop.permute.xlu0 %438
    %v440 = vsel %vm139, %v437, %v439
    %v441 = vsel %vm139, %v439, %v437
    %442 = vset.pattern.permute.xlu0 5
    %443 = vperm.xlu0 %442, %v22
    %v444 = vpop.permute.xlu0 %443
    %v446 = vmul.f32 %v440, %v444
    %v447 = vmul.f32 %v441, %v444
    %v448 = vmul.f32 %v446, %v151
    %v449 = vmul.f32 %v447, %v155
    %v450 = vadd.f32 %v434, %v448
    %v451 = vadd.f32 %v435, %v449
    %452 = vrot.lane.b32.xlu0 %v363, 113
    %v453 = vpop.permute.xlu0 %452
    %454 = vrot.lane.b32.xlu0 %v364, 113
    %v455 = vpop.permute.xlu0 %454
    %v456 = vsel %vm164, %v453, %v455
    %v457 = vsel %vm164, %v455, %v453
    %458 = vset.pattern.permute.xlu0 6
    %459 = vperm.xlu0 %458, %v22
    %v460 = vpop.permute.xlu0 %459
    %v462 = vmul.f32 %v456, %v460
    %v463 = vmul.f32 %v457, %v460
    %v464 = vmul.f32 %v462, %v176
    %v465 = vmul.f32 %v463, %v180
    %v466 = vadd.f32 %v450, %v464
    %v467 = vadd.f32 %v451, %v465
    %468 = vrot.lane.b32.xlu0 %v363, 112
    %v469 = vpop.permute.xlu0 %468
    %470 = vrot.lane.b32.xlu0 %v364, 112
    %v471 = vpop.permute.xlu0 %470
    %v472 = vsel %vm189, %v469, %v471
    %v473 = vsel %vm189, %v471, %v469
    %474 = vset.pattern.permute.xlu0 7
    %475 = vperm.xlu0 %474, %v22
    %v476 = vpop.permute.xlu0 %475
    %v478 = vmul.f32 %v472, %v476
    %v479 = vmul.f32 %v473, %v476
    %v480 = vmul.f32 %v478, %v201
    %v481 = vmul.f32 %v479, %v205
    %v482 = vadd.f32 %v466, %v480
    %v483 = vadd.f32 %v467, %v481
    %484 = vrot.lane.b32.xlu0 %v363, 111
    %v485 = vpop.permute.xlu0 %484
    %486 = vrot.lane.b32.xlu0 %v364, 111
    %v487 = vpop.permute.xlu0 %486
    %v488 = vsel %vm214, %v485, %v487
    %v489 = vsel %vm214, %v487, %v485
    %490 = vset.pattern.permute.xlu0 8
    %491 = vperm.xlu0 %490, %v22
    %v492 = vpop.permute.xlu0 %491
    %v494 = vmul.f32 %v488, %v492
    %v495 = vmul.f32 %v489, %v492
    %v496 = vmul.f32 %v494, %v226
    %v497 = vmul.f32 %v495, %v230
    %v498 = vadd.f32 %v482, %v496
    %v499 = vadd.f32 %v483, %v497
    %v500 = vlaneseq
    %v501 = vshrl.u32 %v500, 7
    %v502 = vsub.s32 0, %v501
    %v503 = vrot.slane %v498, %v502
    %v504 = vlaneseq
    %v505 = vshrl.u32 %v504, 7
    %v506 = vsub.s32 0, %v505
    %v507 = vrot.slane %v499, %v506
    %v508 = vmul.f32 %v238, %v503
    %v509 = vmul.f32 %v238, %v507
    %v510 = vlaneseq
    %v511 = vshrl.u32 %v510, 7
    %v512 = vsub.s32 1, %v511
    %v513 = vrot.slane %v498, %v512
    %v514 = vlaneseq
    %v515 = vshrl.u32 %v514, 7
    %v516 = vsub.s32 1, %v515
    %v517 = vrot.slane %v499, %v516
    %v518 = vmul.f32 %v252, %v513
    %v519 = vmul.f32 %v252, %v517
    %v520 = vadd.f32 %v508, %v518
    %v521 = vadd.f32 %v509, %v519
    %v522 = vadd.f32 %v520, %v268
    %v523 = vadd.f32 %v521, %v268
    %v524 = vmax.f32 %v522, 0.0
    %v525 = vmax.f32 %v523, 0.0
    %v526 = vlaneseq
    %v527 = vshrl.u32 %v526, 7
    %v528 = vsub.s32 2, %v527
    %v529 = vrot.slane %v498, %v528
    %v530 = vlaneseq
    %v531 = vshrl.u32 %v530, 7
    %v532 = vsub.s32 2, %v531
    %v533 = vrot.slane %v499, %v532
    %v534 = vmul.f32 %v238, %v529
    %v535 = vmul.f32 %v238, %v533
    %v536 = vlaneseq
    %v537 = vshrl.u32 %v536, 7
    %v538 = vsub.s32 3, %v537
    %v539 = vrot.slane %v498, %v538
    %v540 = vlaneseq
    %v541 = vshrl.u32 %v540, 7
    %v542 = vsub.s32 3, %v541
    %v543 = vrot.slane %v499, %v542
    %v544 = vmul.f32 %v252, %v539
    %v545 = vmul.f32 %v252, %v543
    %v546 = vadd.f32 %v534, %v544
    %v547 = vadd.f32 %v535, %v545
    %v548 = vadd.f32 %v546, %v268
    %v549 = vadd.f32 %v547, %v268
    %v550 = vmax.f32 %v548, 0.0
    %v551 = vmax.f32 %v549, 0.0
    %v554 = vrot.slane %v524, 2
    %v555 = vrot.slane %v525, 2
    %v558 = vsel %vm362, %v554, %v550
    %v559 = vsel %vm362, %v555, %v551
    %560 = vrot.lane.b32.xlu0 %v558, 17
    %v561 = vpop.permute.xlu0 %560
    %562 = vrot.lane.b32.xlu0 %v559, 17
    %v563 = vpop.permute.xlu0 %562
    %v564 = vsel %vm32, %v561, %v563
    %v565 = vsel %vm32, %v563, %v561
    %v566 = vrot.slane %v374, 4
    %v568 = vmul.f32 %v565, %v566
    %v569 = vmul.f32 %v564, %v566
    %v570 = vmul.f32 %v568, %v45
    %v571 = vmul.f32 %v569, %v49
    %572 = vrot.lane.b32.xlu0 %v558, 16
    %v573 = vpop.permute.xlu0 %572
    %574 = vrot.lane.b32.xlu0 %v559, 16
    %v575 = vpop.permute.xlu0 %574
    %v576 = vsel %vm56, %v573, %v575
    %v577 = vsel %vm56, %v575, %v573
    %v578 = vrot.slane %v388, 4
    %v580 = vmul.f32 %v577, %v578
    %v581 = vmul.f32 %v576, %v578
    %v582 = vmul.f32 %v580, %v68
    %v583 = vmul.f32 %v581, %v72
    %v584 = vadd.f32 %v570, %v582
    %v585 = vadd.f32 %v571, %v583
    %586 = vrot.lane.b32.xlu0 %v558, 15
    %v587 = vpop.permute.xlu0 %586
    %588 = vrot.lane.b32.xlu0 %v559, 15
    %v589 = vpop.permute.xlu0 %588
    %v590 = vsel %vm81, %v587, %v589
    %v591 = vsel %vm81, %v589, %v587
    %v592 = vrot.slane %v404, 4
    %v594 = vmul.f32 %v591, %v592
    %v595 = vmul.f32 %v590, %v592
    %v596 = vmul.f32 %v594, %v93
    %v597 = vmul.f32 %v595, %v97
    %v598 = vadd.f32 %v584, %v596
    %v599 = vadd.f32 %v585, %v597
    %600 = vrot.lane.b32.xlu0 %v558, 1
    %v601 = vpop.permute.xlu0 %600
    %602 = vrot.lane.b32.xlu0 %v559, 1
    %v603 = vpop.permute.xlu0 %602
    %v604 = vsel %vm106, %v601, %v603
    %v605 = vsel %vm106, %v603, %v601
    %v606 = vrot.slane %v420, 4
    %v608 = vmul.f32 %v605, %v606
    %v609 = vmul.f32 %v604, %v606
    %v610 = vmul.f32 %v608, %v118
    %v611 = vmul.f32 %v609, %v122
    %v612 = vadd.f32 %v598, %v610
    %v613 = vadd.f32 %v599, %v611
    %v614 = vrot.slane %v430, 4
    %v616 = vmul.f32 %v558, %v614
    %v617 = vmul.f32 %v559, %v614
    %v618 = vadd.f32 %v612, %v616
    %v619 = vadd.f32 %v613, %v617
    %620 = vrot.lane.b32.xlu0 %v558, 127
    %v621 = vpop.permute.xlu0 %620
    %622 = vrot.lane.b32.xlu0 %v559, 127
    %v623 = vpop.permute.xlu0 %622
    %v624 = vsel %vm139, %v621, %v623
    %v625 = vsel %vm139, %v623, %v621
    %v626 = vrot.slane %v444, 4
    %v628 = vmul.f32 %v624, %v626
    %v629 = vmul.f32 %v625, %v626
    %v630 = vmul.f32 %v628, %v151
    %v631 = vmul.f32 %v629, %v155
    %v632 = vadd.f32 %v618, %v630
    %v633 = vadd.f32 %v619, %v631
    %634 = vrot.lane.b32.xlu0 %v558, 113
    %v635 = vpop.permute.xlu0 %634
    %636 = vrot.lane.b32.xlu0 %v559, 113
    %v637 = vpop.permute.xlu0 %636
    %v638 = vsel %vm164, %v635, %v637
    %v639 = vsel %vm164, %v637, %v635
    %v640 = vrot.slane %v460, 4
    %v642 = vmul.f32 %v638, %v640
    %v643 = vmul.f32 %v639, %v640
    %v644 = vmul.f32 %v642, %v176
    %v645 = vmul.f32 %v643, %v180
    %v646 = vadd.f32 %v632, %v644
    %v647 = vadd.f32 %v633, %v645
    %648 = vrot.lane.b32.xlu0 %v558, 112
    %v649 = vpop.permute.xlu0 %648
    %650 = vrot.lane.b32.xlu0 %v559, 112
    %v651 = vpop.permute.xlu0 %650
    %v652 = vsel %vm189, %v649, %v651
    %v653 = vsel %vm189, %v651, %v649
    %v654 = vrot.slane %v476, 4
    %v656 = vmul.f32 %v652, %v654
    %v657 = vmul.f32 %v653, %v654
    %v658 = vmul.f32 %v656, %v201
    %v659 = vmul.f32 %v657, %v205
    %v660 = vadd.f32 %v646, %v658
    %v661 = vadd.f32 %v647, %v659
    %662 = vrot.lane.b32.xlu0 %v558, 111
    %v663 = vpop.permute.xlu0 %662
    %664 = vrot.lane.b32.xlu0 %v559, 111
    %v665 = vpop.permute.xlu0 %664
    %v666 = vsel %vm214, %v663, %v665
    %v667 = vsel %vm214, %v665, %v663
    %v668 = vrot.slane %v492, 4
    %v670 = vmul.f32 %v666, %v668
    %v671 = vmul.f32 %v667, %v668
    %v672 = vmul.f32 %v670, %v226
    %v673 = vmul.f32 %v671, %v230
    %v674 = vadd.f32 %v660, %v672
    %v675 = vadd.f32 %v661, %v673
    %677 = vset.pattern.permute.xlu0 0
    %678 = vperm.xlu0 %677, %v24
    %v679 = vpop.permute.xlu0 %678
    %v681 = vlaneseq
    %v682 = vshrl.u32 %v681, 7
    %v683 = vsub.s32 0, %v682
    %v684 = vrot.slane %v674, %v683
    %v685 = vlaneseq
    %v686 = vshrl.u32 %v685, 7
    %v687 = vsub.s32 0, %v686
    %v688 = vrot.slane %v675, %v687
    %v689 = vmul.f32 %v238, %v684
    %v690 = vmul.f32 %v238, %v688
    %v691 = vmul.f32 %v679, %v684
    %v692 = vmul.f32 %v679, %v688
    %693 = vset.pattern.permute.xlu0 1
    %694 = vperm.xlu0 %693, %v24
    %v695 = vpop.permute.xlu0 %694
    %v697 = vlaneseq
    %v698 = vshrl.u32 %v697, 7
    %v699 = vsub.s32 1, %v698
    %v700 = vrot.slane %v674, %v699
    %v701 = vlaneseq
    %v702 = vshrl.u32 %v701, 7
    %v703 = vsub.s32 1, %v702
    %v704 = vrot.slane %v675, %v703
    %v705 = vmul.f32 %v252, %v700
    %v706 = vmul.f32 %v252, %v704
    %v707 = vmul.f32 %v695, %v700
    %v708 = vmul.f32 %v695, %v704
    %v709 = vadd.f32 %v689, %v705
    %v710 = vadd.f32 %v690, %v706
    %v711 = vadd.f32 %v691, %v707
    %v712 = vadd.f32 %v692, %v708
    %713 = vset.pattern.permute.xlu0 2
    %714 = vperm.xlu0 %713, %v24
    %v715 = vpop.permute.xlu0 %714
    %v717 = vadd.f32 %v709, %v268
    %v718 = vadd.f32 %v710, %v268
    %v719 = vadd.f32 %v711, %v715
    %v720 = vadd.f32 %v712, %v715
    %v721 = vmax.f32 %v717, 0.0
    %v722 = vmax.f32 %v718, 0.0
    %v723 = vmax.f32 %v719, 0.0
    %v724 = vmax.f32 %v720, 0.0
    %v725 = vlaneseq
    %v726 = vshrl.u32 %v725, 7
    %v727 = vsub.s32 2, %v726
    %v728 = vrot.slane %v674, %v727
    %v729 = vlaneseq
    %v730 = vshrl.u32 %v729, 7
    %v731 = vsub.s32 2, %v730
    %v732 = vrot.slane %v675, %v731
    %v733 = vmul.f32 %v238, %v728
    %v734 = vmul.f32 %v238, %v732
    %v735 = vmul.f32 %v679, %v728
    %v736 = vmul.f32 %v679, %v732
    %v737 = vlaneseq
    %v738 = vshrl.u32 %v737, 7
    %v739 = vsub.s32 3, %v738
    %v740 = vrot.slane %v674, %v739
    %v741 = vlaneseq
    %v742 = vshrl.u32 %v741, 7
    %v743 = vsub.s32 3, %v742
    %v744 = vrot.slane %v675, %v743
    %v745 = vmul.f32 %v252, %v740
    %v746 = vmul.f32 %v252, %v744
    %v747 = vmul.f32 %v695, %v740
    %v748 = vmul.f32 %v695, %v744
    %v749 = vadd.f32 %v733, %v745
    %v750 = vadd.f32 %v734, %v746
    %v751 = vadd.f32 %v735, %v747
    %v752 = vadd.f32 %v736, %v748
    %v753 = vadd.f32 %v749, %v268
    %v754 = vadd.f32 %v750, %v268
    %v755 = vadd.f32 %v751, %v715
    %v756 = vadd.f32 %v752, %v715
    %v757 = vmax.f32 %v753, 0.0
    %v758 = vmax.f32 %v754, 0.0
    %v759 = vmax.f32 %v755, 0.0
    %v760 = vmax.f32 %v756, 0.0
    %vm765 = vcmask 1043456
    %v766 = vrot.slane %v721, 4
    %v767 = vrot.slane %v723, 4
    %v768 = vsel %vm765, %v766, %v767
    %v769 = vrot.slane %v722, 4
    %v770 = vrot.slane %v724, 4
    %v771 = vsel %vm765, %v769, %v770
    %v778 = vrot.slane %v757, 4
    %v779 = vrot.slane %v759, 4
    %v780 = vsel %vm765, %v778, %v779
    %v781 = vrot.slane %v758, 4
    %v782 = vrot.slane %v760, 4
    %v783 = vsel %vm765, %v781, %v782
    %787 = vset.pattern.permute.xlu0 0
    %788 = vperm.xlu0 %787, %v25
    %v789 = vpop.permute.xlu0 %788
    %v791 = vlaneseq
    %v792 = vshrl.u32 %v791, 7
    %v793 = vsub.s32 0, %v792
    %v794 = vrot.slane %v15, %v793
    %v795 = vlaneseq
    %v796 = vshrl.u32 %v795, 7
    %v797 = vsub.s32 0, %v796
    %v798 = vrot.slane %v16, %v797
    %v799 = vmul.f32 %v679, %v794
    %v800 = vmul.f32 %v679, %v798
    %v801 = vmul.f32 %v789, %v794
    %v802 = vmul.f32 %v789, %v798
    %v807 = vrot.slane %v799, 4
    %v808 = vrot.slane %v801, 4
    %v809 = vsel %vm765, %v807, %v808
    %v810 = vrot.slane %v800, 4
    %v811 = vrot.slane %v802, 4
    %v812 = vsel %vm765, %v810, %v811
    %v815 = vadd.f32 %v768, %v809
    %v816 = vadd.f32 %v771, %v812
    %817 = vset.pattern.permute.xlu0 1
    %818 = vperm.xlu0 %817, %v25
    %v819 = vpop.permute.xlu0 %818
    %v821 = vlaneseq
    %v822 = vshrl.u32 %v821, 7
    %v823 = vsub.s32 1, %v822
    %v824 = vrot.slane %v15, %v823
    %v825 = vlaneseq
    %v826 = vshrl.u32 %v825, 7
    %v827 = vsub.s32 1, %v826
    %v828 = vrot.slane %v16, %v827
    %v829 = vmul.f32 %v695, %v824
    %v830 = vmul.f32 %v695, %v828
    %v831 = vmul.f32 %v819, %v824
    %v832 = vmul.f32 %v819, %v828
    %v837 = vrot.slane %v829, 4
    %v838 = vrot.slane %v831, 4
    %v839 = vsel %vm765, %v837, %v838
    %v840 = vrot.slane %v830, 4
    %v841 = vrot.slane %v832, 4
    %v842 = vsel %vm765, %v840, %v841
    %v845 = vadd.f32 %v815, %v839
    %v846 = vadd.f32 %v816, %v842
    %847 = vset.pattern.permute.xlu0 2
    %848 = vperm.xlu0 %847, %v25
    %v849 = vpop.permute.xlu0 %848
    %v851 = vlaneseq
    %v852 = vshrl.u32 %v851, 7
    %v853 = vsub.s32 2, %v852
    %v854 = vrot.slane %v15, %v853
    %v855 = vlaneseq
    %v856 = vshrl.u32 %v855, 7
    %v857 = vsub.s32 2, %v856
    %v858 = vrot.slane %v16, %v857
    %v859 = vmul.f32 %v715, %v854
    %v860 = vmul.f32 %v715, %v858
    %v861 = vmul.f32 %v849, %v854
    %v862 = vmul.f32 %v849, %v858
    %v867 = vrot.slane %v859, 4
    %v868 = vrot.slane %v861, 4
    %v869 = vsel %vm765, %v867, %v868
    %v870 = vrot.slane %v860, 4
    %v871 = vrot.slane %v862, 4
    %v872 = vsel %vm765, %v870, %v871
    %v875 = vadd.f32 %v845, %v869
    %v876 = vadd.f32 %v846, %v872
    %877 = vset.pattern.permute.xlu0 3
    %878 = vperm.xlu0 %877, %v24
    %v879 = vpop.permute.xlu0 %878
    %881 = vset.pattern.permute.xlu0 3
    %882 = vperm.xlu0 %881, %v25
    %v883 = vpop.permute.xlu0 %882
    %v885 = vlaneseq
    %v886 = vshrl.u32 %v885, 7
    %v887 = vsub.s32 3, %v886
    %v888 = vrot.slane %v15, %v887
    %v889 = vlaneseq
    %v890 = vshrl.u32 %v889, 7
    %v891 = vsub.s32 3, %v890
    %v892 = vrot.slane %v16, %v891
    %v893 = vmul.f32 %v879, %v888
    %v894 = vmul.f32 %v879, %v892
    %v895 = vmul.f32 %v883, %v888
    %v896 = vmul.f32 %v883, %v892
    %v901 = vrot.slane %v893, 4
    %v902 = vrot.slane %v895, 4
    %v903 = vsel %vm765, %v901, %v902
    %v904 = vrot.slane %v894, 4
    %v905 = vrot.slane %v896, 4
    %v906 = vsel %vm765, %v904, %v905
    %v909 = vadd.f32 %v875, %v903
    %v910 = vadd.f32 %v876, %v906
    %v911 = vlaneseq
    %v912 = vshrl.u32 %v911, 7
    %v913 = vsub.s32 4, %v912
    %v914 = vrot.slane %v15, %v913
    %v915 = vlaneseq
    %v916 = vshrl.u32 %v915, 7
    %v917 = vsub.s32 4, %v916
    %v918 = vrot.slane %v16, %v917
    %v919 = vmul.f32 %v679, %v914
    %v920 = vmul.f32 %v679, %v918
    %v921 = vmul.f32 %v789, %v914
    %v922 = vmul.f32 %v789, %v918
    %v927 = vrot.slane %v919, 4
    %v928 = vrot.slane %v921, 4
    %v929 = vsel %vm765, %v927, %v928
    %v930 = vrot.slane %v920, 4
    %v931 = vrot.slane %v922, 4
    %v932 = vsel %vm765, %v930, %v931
    %v935 = vadd.f32 %v780, %v929
    %v936 = vadd.f32 %v783, %v932
    %v937 = vlaneseq
    %v938 = vshrl.u32 %v937, 7
    %v939 = vsub.s32 5, %v938
    %v940 = vrot.slane %v15, %v939
    %v941 = vlaneseq
    %v942 = vshrl.u32 %v941, 7
    %v943 = vsub.s32 5, %v942
    %v944 = vrot.slane %v16, %v943
    %v945 = vmul.f32 %v695, %v940
    %v946 = vmul.f32 %v695, %v944
    %v947 = vmul.f32 %v819, %v940
    %v948 = vmul.f32 %v819, %v944
    %v953 = vrot.slane %v945, 4
    %v954 = vrot.slane %v947, 4
    %v955 = vsel %vm765, %v953, %v954
    %v956 = vrot.slane %v946, 4
    %v957 = vrot.slane %v948, 4
    %v958 = vsel %vm765, %v956, %v957
    %v961 = vadd.f32 %v935, %v955
    %v962 = vadd.f32 %v936, %v958
    %v963 = vlaneseq
    %v964 = vshrl.u32 %v963, 7
    %v965 = vsub.s32 6, %v964
    %v966 = vrot.slane %v15, %v965
    %v967 = vlaneseq
    %v968 = vshrl.u32 %v967, 7
    %v969 = vsub.s32 6, %v968
    %v970 = vrot.slane %v16, %v969
    %v971 = vmul.f32 %v715, %v966
    %v972 = vmul.f32 %v715, %v970
    %v973 = vmul.f32 %v849, %v966
    %v974 = vmul.f32 %v849, %v970
    %v979 = vrot.slane %v971, 4
    %v980 = vrot.slane %v973, 4
    %v981 = vsel %vm765, %v979, %v980
    %v982 = vrot.slane %v972, 4
    %v983 = vrot.slane %v974, 4
    %v984 = vsel %vm765, %v982, %v983
    %v987 = vadd.f32 %v961, %v981
    %v988 = vadd.f32 %v962, %v984
    %v989 = vlaneseq
    %v990 = vshrl.u32 %v989, 7
    %v991 = vsub.s32 7, %v990
    %v992 = vrot.slane %v15, %v991
    %v993 = vlaneseq
    %v994 = vshrl.u32 %v993, 7
    %v995 = vsub.s32 7, %v994
    %v996 = vrot.slane %v16, %v995
    %v997 = vmul.f32 %v879, %v992
    %v998 = vmul.f32 %v879, %v996
    %v999 = vmul.f32 %v883, %v992
    %v1000 = vmul.f32 %v883, %v996
    %v1005 = vrot.slane %v997, 4
    %v1006 = vrot.slane %v999, 4
    %v1007 = vsel %vm765, %v1005, %v1006
    %v1008 = vrot.slane %v998, 4
    %v1009 = vrot.slane %v1000, 4
    %v1010 = vsel %vm765, %v1008, %v1009
    %v1013 = vadd.f32 %v987, %v1007
    %v1014 = vadd.f32 %v988, %v1010
    %1015 = vst [vmem:[#allocation2] sm:$0xff] %v909
    %1016 = vst [vmem:[#allocation2 + $0x8] sm:$0xff] %v910
    %1017 = vst [vmem:[#allocation2 + $0x10] sm:$0xff] %v1013
    %1018 = vst [vmem:[#allocation2 + $0x18] sm:$0xff] %v1014
    // Predicated region
    $region14: #{tpu_custom_call.1} parent=1 // pred_check
      _
    $region15: #{tpu_custom_call.1} parent=1 // pred_check_branch
      %1020 = sbr.rel (0) target = $region17
    $region16: #{tpu_custom_call.1} parent=1 // pred_region
      %s1022 = ssub.s32 512, 512
      %1023 = vsyncadd [#allocation3], %s1022
      %s1024 = sshll.u32 [#allocation2], 4
      %s1025 = int_to_ptr.vmem [resolvable:$true] %s1024
      %1030 = dma.vmem_to_hbm [thread:$0]  %s1025, 512, %s3, [#allocation3], 256, 256, 16
    $region17: #{tpu_custom_call.1} parent=1 // pred_fallthru
      _
    // Predicated region
    $region18: #{tpu_custom_call.1} parent=1 // pred_check
      _
    $region19: #{tpu_custom_call.1} parent=1 // pred_check_branch
      %1032 = sbr.rel (0) target = $region21
    $region20: #{tpu_custom_call.1} parent=1 // pred_region
      %1033 = dma.done [#allocation3], 512
    $region21: #{tpu_custom_call.1} parent=1 // pred_fallthru
      _
    %1034 = vsyncpa [#allocation3], 1

</llo_original>
